<compile_context>
chip_gen: v6e
topology: v6e:2x2x1
jax: 0.10.0
libtpu: 0.0.40
codegen_flags: <defaults>
</compile_context>

<pallas_src>
import jax
import jax.numpy as jnp
from jax.experimental import pallas as pl
from jax.experimental.pallas import tpu as pltpu

C_HIDDEN = 16  # diff_CSDI "channels" for the 1x1-conv stand-in


def workloaddiff_loss(observed_data, observed_mask, cond_mask,
                      sqrt_alpha_b, sqrt_1m_alpha_b, noise, params,
                      row_block=2048, mlp_dtype=jnp.float32):
    """Masked-MSE diffusion training loss (calc_loss, is_train=1) on TPU."""
    B, K, L = observed_data.shape
    M = K * L
    rows_b = pl.cdiv(M, 128)          # lane-dense rows per batch element
    P = rows_b * 128
    C = params["w1a"].shape[0]
    cast_mlp = jnp.dtype(mlp_dtype) != jnp.dtype(jnp.float32)

    def to_rows(x):
        x = x.reshape(B, M).astype(jnp.float32)
        if P != M:
            # TODO(synk): this lane pad materializes one extra HBM copy pass when
            # K*L % 128 != 0; pick K*L a multiple of 128 upstream to make the
            # reshape below copy-free.
            x = jnp.pad(x, ((0, 0), (0, P - M)))
        return x.reshape(B, rows_b, 128)

    data3, noise3, obs3, cond3 = map(
        to_rows, (observed_data, noise, observed_mask, cond_mask))

    # Rows-per-block: either the full per-batch extent (no (8,128) constraint) or a
    # multiple of 8; ragged last block handled in-kernel (no row-pad copy pass).
    if rows_b <= row_block:
        rb = rows_b
    else:
        rb = max(8, (row_block // 8) * 8)
    nj = pl.cdiv(rows_b, rb)          # inner ("arbitrary") reduction extent
    ragged = (rows_b % rb) != 0

    def kernel(data_ref, noise_ref, obs_ref, cond_ref,
               sa_ref, s1a_ref, w1a_ref, w1b_ref, b1_ref, w2_ref, b2_ref,
               ss_out, ne_out, acc_ss, acc_ne):
        b = pl.program_id(0)
        j = pl.program_id(1)

        @pl.when(j == 0)
        def _():
            acc_ss[...] = jnp.zeros_like(acc_ss)
            acc_ne[...] = jnp.zeros_like(acc_ne)

        # Hoist all SMEM scalar reads once, ahead of the vector work.
        sa = sa_ref[b]                    # sqrt(alpha_t) for this batch element
        s1a = s1a_ref[b]                  # sqrt(1 - alpha_t)
        w1a = [w1a_ref[c] for c in range(C)]
        w1b = [w1b_ref[c] for c in range(C)]
        b1 = [b1_ref[c] for c in range(C)]
        w2 = [w2_ref[c] for c in range(C)]
        b2 = b2_ref[0]
        if cast_mlp:
            w1a = [w.astype(mlp_dtype) for w in w1a]
            w1b = [w.astype(mlp_dtype) for w in w1b]
            b1 = [w.astype(mlp_dtype) for w in b1]
            w2 = [w.astype(mlp_dtype) for w in w2]

        data = data_ref[...]              # (rb, 128)
        noise_v = noise_ref[...]
        obs_m = obs_ref[...]
        cond_m = cond_ref[...]

        # forward diffusion + set_input_to_diffmodel
        noisy = sa * data + s1a * noise_v
        cond_obs = cond_m * data

        co = cond_obs.astype(mlp_dtype)
        nz = noisy.astype(mlp_dtype)

        # diff_CSDI stand-in: 1x1 conv (2 -> C) + relu + 1x1 conv (C -> 1), pointwise,
        # unrolled on the VPU.  At C=16 an MXU formulation would waste >99% of the
        # systolic array, so the VPU loop is the faster choice.
        # TODO(synk): the real diff_CSDI (diffusion-step embedding + transformer
        # residual blocks) is not defined in the provided source; if the real channel
        # count (>=64) is used, put channels on the lane axis, cast to bf16, and run
        # [M,2]@[2,C] -> relu -> [M,C]@[C,1] on the MXU with
        # preferred_element_type=jnp.float32 instead of this loop.
        pred = None
        for c in range(C):                # static unroll over hidden channels
            h = jnp.maximum(w1a[c] * co + w1b[c] * nz + b1[c], 0)
            term = w2[c] * h
            pred = term if pred is None else pred + term
        pred = pred.astype(jnp.float32)

        # masked MSE pieces (b2 folded into the residual: one add, no broadcast init)
        tmask = obs_m - cond_m
        res = ((noise_v - pred) - b2) * tmask

        if ragged:
            # Last row-block of each batch element may read past rows_b (undefined
            # contents); zero those rows' contributions.  Only emitted when needed.
            row = jax.lax.broadcasted_iota(jnp.int32, (rb, 128), 0)
            valid = (j * rb + row) < rows_b
            res = jnp.where(valid, res, 0.0)
            tmask = jnp.where(valid, tmask, 0.0)

        acc_ss[...] += res * res
        acc_ne[...] += tmask

        @pl.when(j == pl.num_programs(1) - 1)
        def _():
            # XLU sublane reduce (idle slot in this VALU-bound kernel), once per batch.
            ss_out[...] = jnp.sum(acc_ss[...], axis=0, keepdims=True)
            ne_out[...] = jnp.sum(acc_ne[...], axis=0, keepdims=True)

    big_spec = pl.BlockSpec((None, rb, 128), lambda b, j: (b, j, 0))
    out_spec = pl.BlockSpec((None, 1, 128), lambda b, j: (b, 0, 0))
    smem_spec = pl.BlockSpec(memory_space=pltpu.MemorySpace.SMEM)

    ss_part, ne_part = pl.pallas_call(
        kernel,
        out_shape=(jax.ShapeDtypeStruct((B, 1, 128), jnp.float32),
                   jax.ShapeDtypeStruct((B, 1, 128), jnp.float32)),
        grid_spec=pltpu.PrefetchScalarGridSpec(
            num_scalar_prefetch=0,
            grid=(B, nj),
            in_specs=[big_spec] * 4 + [smem_spec] * 7,
            out_specs=(out_spec, out_spec),
            scratch_shapes=[pltpu.VMEM((rb, 128), jnp.float32),
                            pltpu.VMEM((rb, 128), jnp.float32)]),
        compiler_params=pltpu.CompilerParams(
            dimension_semantics=("parallel", "arbitrary")),
    )(data3, noise3, obs3, cond3,
      sqrt_alpha_b.astype(jnp.float32), sqrt_1m_alpha_b.astype(jnp.float32),
      params["w1a"], params["w1b"], params["b1"], params["w2"], params["b2"])

    # Tiny epilogue over 2 x (B,1,128) partials.
    ss = jnp.sum(ss_part)
    ne = jnp.sum(ne_part)
    return ss / jnp.where(ne > 0, ne, 1.0)


def reference_loss(observed_data, observed_mask, cond_mask,
                   sqrt_a, sqrt_1ma, noise, params):
    """Pure-JAX reference for the same forward pass."""
    sa = sqrt_a[:, None, None]
    s1a = sqrt_1ma[:, None, None]
    noisy = sa * observed_data + s1a * noise
    cond_obs = cond_mask * observed_data
    w1a, w1b, b1, w2, b2 = (params[k] for k in ("w1a", "w1b", "b1", "w2", "b2"))
    h = jax.nn.relu(w1a[None, :, None, None] * cond_obs[:, None]
                    + w1b[None, :, None, None] * noisy[:, None]
                    + b1[None, :, None, None])
    pred = jnp.sum(w2[None, :, None, None] * h, axis=1) + b2[0]
    tmask = observed_mask - cond_mask
    res = (noise - pred) * tmask
    num_eval = tmask.sum()
    return (res ** 2).sum() / jnp.where(num_eval > 0, num_eval, 1.0)


if __name__ == "__main__":
    # Diffusion schedule from __init__ ('quad').
    num_steps = 50
    beta_start, beta_end = 1e-4, 0.5
    beta = jnp.linspace(beta_start ** 0.5, beta_end ** 0.5, num_steps,
                        dtype=jnp.float32) ** 2
    alpha = jnp.cumprod(1.0 - beta)

    # diff_CSDI stand-in parameters (deterministic init).
    kp = jax.random.split(jax.random.PRNGKey(0), 4)
    w1a = jax.random.normal(kp[0], (C_HIDDEN,), jnp.float32)
    w1b = jax.random.normal(kp[1], (C_HIDDEN,), jnp.float32)
    b1 = jnp.zeros((C_HIDDEN,), jnp.float32)
    w2 = jax.random.normal(kp[2], (C_HIDDEN,), jnp.float32) * (1.0 / C_HIDDEN) ** 0.5
    b2 = jnp.zeros((1,), jnp.float32)
    params = dict(w1a=w1a, w1b=w1b, b1=b1, w2=w2, b2=b2)

    def run_case(seed, B, K, L, row_block=2048):
        ks = jax.random.split(jax.random.PRNGKey(seed), 5)
        # TODO(synk): process_data(batch) is not defined in the provided base class; we
        # build observed_data / observed_mask / gt_mask directly (cond_mask = gt_mask).
        observed_data = jax.random.normal(ks[0], (B, K, L), jnp.float32)
        observed_mask = (jax.random.uniform(ks[1], (B, K, L)) > 0.1).astype(jnp.float32)
        gt_mask = observed_mask * (jax.random.uniform(ks[2], (B, K, L)) > 0.3
                                   ).astype(jnp.float32)
        cond_mask = gt_mask
        # calc_loss (is_train=1): random diffusion step per batch element.
        t = jax.random.randint(ks[3], (B,), 0, num_steps)
        current_alpha = alpha[t]
        sqrt_a = jnp.sqrt(current_alpha)
        sqrt_1ma = jnp.sqrt(1.0 - current_alpha)
        noise = jax.random.normal(ks[4], (B, K, L), jnp.float32)

        loss = workloaddiff_loss(observed_data, observed_mask, cond_mask,
                                 sqrt_a, sqrt_1ma, noise, params,
                                 row_block=row_block)
        loss = jax.block_until_ready(loss)
        ref = reference_loss(observed_data, observed_mask, cond_mask,
                             sqrt_a, sqrt_1ma, noise, params)
        assert jnp.allclose(loss, ref, rtol=1e-4, atol=1e-5), (
            (B, K, L), float(loss), float(ref))

    # primary small case (K*L = 128: copy-free lane-dense reshape, one block/batch)
    run_case(0, B=2, K=8, L=16)
    # multi-block + ragged-tail path (rows_b=9, rb=8 -> in-kernel iota mask)
    run_case(1, B=2, K=24, L=48, row_block=8)
    # lane-pad path (K*L=180, padded to 256 lanes; zero pad -> zero contribution)
    run_case(2, B=2, K=9, L=20)

    print("KERNEL_OK")
</pallas_src>

<mosaic_0001>
module attributes {stable_mosaic.version = 11 : i64} {
  func.func @kernel(%arg0: i32, %arg1: i32, %arg2: memref<1x1x128xf32, #tpu.memory_space<vmem>>, %arg3: memref<1x1x128xf32, #tpu.memory_space<vmem>>, %arg4: memref<1x1x128xf32, #tpu.memory_space<vmem>>, %arg5: memref<1x1x128xf32, #tpu.memory_space<vmem>>, %arg6: memref<2xf32, #tpu.memory_space<smem>>, %arg7: memref<2xf32, #tpu.memory_space<smem>>, %arg8: memref<16xf32, #tpu.memory_space<smem>>, %arg9: memref<16xf32, #tpu.memory_space<smem>>, %arg10: memref<16xf32, #tpu.memory_space<smem>>, %arg11: memref<16xf32, #tpu.memory_space<smem>>, %arg12: memref<1xf32, #tpu.memory_space<smem>>, %arg13: memref<1x1x128xf32, #tpu.memory_space<vmem>>, %arg14: memref<1x1x128xf32, #tpu.memory_space<vmem>>, %arg15: memref<1x128xf32, #tpu.memory_space<vmem>>, %arg16: memref<1x128xf32, #tpu.memory_space<vmem>>) attributes {dimension_semantics = [#tpu.dimension_semantics<parallel>, #tpu.dimension_semantics<arbitrary>], iteration_bounds = array<i64: 2, 1>, scalar_prefetch = 0 : i64, scratch_operands = 2 : i64, tpu.core_type = #tpu.core_type<tc>, window_params = [{transform_indices = @transform_0, window_bounds = array<i64: 1, 1, 128>}, {transform_indices = @transform_1, window_bounds = array<i64: 1, 1, 128>}, {transform_indices = @transform_2, window_bounds = array<i64: 1, 1, 128>}, {transform_indices = @transform_3, window_bounds = array<i64: 1, 1, 128>}, {transform_indices = @transform_4, window_bounds = array<i64: 2>}, {transform_indices = @transform_5, window_bounds = array<i64: 2>}, {transform_indices = @transform_6, window_bounds = array<i64: 16>}, {transform_indices = @transform_7, window_bounds = array<i64: 16>}, {transform_indices = @transform_8, window_bounds = array<i64: 16>}, {transform_indices = @transform_9, window_bounds = array<i64: 16>}, {transform_indices = @transform_10, window_bounds = array<i64: 1>}, {transform_indices = @transform_11, window_bounds = array<i64: 1, 1, 128>}, {transform_indices = @transform_12, window_bounds = array<i64: 1, 1, 128>}]} {
    %c0_i32 = arith.constant 0 : i32
    %0 = arith.cmpi eq, %arg1, %c0_i32 : i32
    %1 = arith.extui %0 : i1 to i32
    %c0_i32_0 = arith.constant 0 : i32
    %2 = arith.cmpi ne, %1, %c0_i32_0 : i32
    scf.if %2 {
      %cst_87 = arith.constant 0.000000e+00 : f32
      %292 = vector.broadcast %cst_87 : f32 to vector<1x128xf32>
      %c0_88 = arith.constant 0 : index
      %c0_89 = arith.constant 0 : index
      %293 = vector.load %arg15[%c0_88, %c0_89] : memref<1x128xf32, #tpu.memory_space<vmem>>, vector<1x128xf32>
      tpu.vector_store %arg15[%c0_88, %c0_89], %292 {strides = array<i32>} : memref<1x128xf32, #tpu.memory_space<vmem>>, vector<1x128xf32>,
      %cst_90 = arith.constant 0.000000e+00 : f32
      %294 = vector.broadcast %cst_90 : f32 to vector<1x128xf32>
      %c0_91 = arith.constant 0 : index
      %c0_92 = arith.constant 0 : index
      %295 = vector.load %arg16[%c0_91, %c0_92] : memref<1x128xf32, #tpu.memory_space<vmem>>, vector<1x128xf32>
      tpu.vector_store %arg16[%c0_91, %c0_92], %294 {strides = array<i32>} : memref<1x128xf32, #tpu.memory_space<vmem>>, vector<1x128xf32>,
    } else {
    }
    %3 = arith.index_cast %arg0 : i32 to index
    %4 = memref.load %arg6[%3] : memref<2xf32, #tpu.memory_space<smem>>
    %5 = arith.index_cast %arg0 : i32 to index
    %6 = memref.load %arg7[%5] : memref<2xf32, #tpu.memory_space<smem>>
    %c0 = arith.constant 0 : index
    %7 = memref.load %arg8[%c0] : memref<16xf32, #tpu.memory_space<smem>>
    %c1 = arith.constant 1 : index
    %8 = memref.load %arg8[%c1] : memref<16xf32, #tpu.memory_space<smem>>
    %c2 = arith.constant 2 : index
    %9 = memref.load %arg8[%c2] : memref<16xf32, #tpu.memory_space<smem>>
    %c3 = arith.constant 3 : index
    %10 = memref.load %arg8[%c3] : memref<16xf32, #tpu.memory_space<smem>>
    %c4 = arith.constant 4 : index
    %11 = memref.load %arg8[%c4] : memref<16xf32, #tpu.memory_space<smem>>
    %c5 = arith.constant 5 : index
    %12 = memref.load %arg8[%c5] : memref<16xf32, #tpu.memory_space<smem>>
    %c6 = arith.constant 6 : index
    %13 = memref.load %arg8[%c6] : memref<16xf32, #tpu.memory_space<smem>>
    %c7 = arith.constant 7 : index
    %14 = memref.load %arg8[%c7] : memref<16xf32, #tpu.memory_space<smem>>
    %c8 = arith.constant 8 : index
    %15 = memref.load %arg8[%c8] : memref<16xf32, #tpu.memory_space<smem>>
    %c9 = arith.constant 9 : index
    %16 = memref.load %arg8[%c9] : memref<16xf32, #tpu.memory_space<smem>>
    %c10 = arith.constant 10 : index
    %17 = memref.load %arg8[%c10] : memref<16xf32, #tpu.memory_space<smem>>
    %c11 = arith.constant 11 : index
    %18 = memref.load %arg8[%c11] : memref<16xf32, #tpu.memory_space<smem>>
    %c12 = arith.constant 12 : index
    %19 = memref.load %arg8[%c12] : memref<16xf32, #tpu.memory_space<smem>>
    %c13 = arith.constant 13 : index
    %20 = memref.load %arg8[%c13] : memref<16xf32, #tpu.memory_space<smem>>
    %c14 = arith.constant 14 : index
    %21 = memref.load %arg8[%c14] : memref<16xf32, #tpu.memory_space<smem>>
    %c15 = arith.constant 15 : index
    %22 = memref.load %arg8[%c15] : memref<16xf32, #tpu.memory_space<smem>>
    %c0_1 = arith.constant 0 : index
    %23 = memref.load %arg9[%c0_1] : memref<16xf32, #tpu.memory_space<smem>>
    %c1_2 = arith.constant 1 : index
    %24 = memref.load %arg9[%c1_2] : memref<16xf32, #tpu.memory_space<smem>>
    %c2_3 = arith.constant 2 : index
    %25 = memref.load %arg9[%c2_3] : memref<16xf32, #tpu.memory_space<smem>>
    %c3_4 = arith.constant 3 : index
    %26 = memref.load %arg9[%c3_4] : memref<16xf32, #tpu.memory_space<smem>>
    %c4_5 = arith.constant 4 : index
    %27 = memref.load %arg9[%c4_5] : memref<16xf32, #tpu.memory_space<smem>>
    %c5_6 = arith.constant 5 : index
    %28 = memref.load %arg9[%c5_6] : memref<16xf32, #tpu.memory_space<smem>>
    %c6_7 = arith.constant 6 : index
    %29 = memref.load %arg9[%c6_7] : memref<16xf32, #tpu.memory_space<smem>>
    %c7_8 = arith.constant 7 : index
    %30 = memref.load %arg9[%c7_8] : memref<16xf32, #tpu.memory_space<smem>>
    %c8_9 = arith.constant 8 : index
    %31 = memref.load %arg9[%c8_9] : memref<16xf32, #tpu.memory_space<smem>>
    %c9_10 = arith.constant 9 : index
    %32 = memref.load %arg9[%c9_10] : memref<16xf32, #tpu.memory_space<smem>>
    %c10_11 = arith.constant 10 : index
    %33 = memref.load %arg9[%c10_11] : memref<16xf32, #tpu.memory_space<smem>>
    %c11_12 = arith.constant 11 : index
    %34 = memref.load %arg9[%c11_12] : memref<16xf32, #tpu.memory_space<smem>>
    %c12_13 = arith.constant 12 : index
    %35 = memref.load %arg9[%c12_13] : memref<16xf32, #tpu.memory_space<smem>>
    %c13_14 = arith.constant 13 : index
    %36 = memref.load %arg9[%c13_14] : memref<16xf32, #tpu.memory_space<smem>>
    %c14_15 = arith.constant 14 : index
    %37 = memref.load %arg9[%c14_15] : memref<16xf32, #tpu.memory_space<smem>>
    %c15_16 = arith.constant 15 : index
    %38 = memref.load %arg9[%c15_16] : memref<16xf32, #tpu.memory_space<smem>>
    %c0_17 = arith.constant 0 : index
    %39 = memref.load %arg10[%c0_17] : memref<16xf32, #tpu.memory_space<smem>>
    %c1_18 = arith.constant 1 : index
    %40 = memref.load %arg10[%c1_18] : memref<16xf32, #tpu.memory_space<smem>>
    %c2_19 = arith.constant 2 : index
    %41 = memref.load %arg10[%c2_19] : memref<16xf32, #tpu.memory_space<smem>>
    %c3_20 = arith.constant 3 : index
    %42 = memref.load %arg10[%c3_20] : memref<16xf32, #tpu.memory_space<smem>>
    %c4_21 = arith.constant 4 : index
    %43 = memref.load %arg10[%c4_21] : memref<16xf32, #tpu.memory_space<smem>>
    %c5_22 = arith.constant 5 : index
    %44 = memref.load %arg10[%c5_22] : memref<16xf32, #tpu.memory_space<smem>>
    %c6_23 = arith.constant 6 : index
    %45 = memref.load %arg10[%c6_23] : memref<16xf32, #tpu.memory_space<smem>>
    %c7_24 = arith.constant 7 : index
    %46 = memref.load %arg10[%c7_24] : memref<16xf32, #tpu.memory_space<smem>>
    %c8_25 = arith.constant 8 : index
    %47 = memref.load %arg10[%c8_25] : memref<16xf32, #tpu.memory_space<smem>>
    %c9_26 = arith.constant 9 : index
    %48 = memref.load %arg10[%c9_26] : memref<16xf32, #tpu.memory_space<smem>>
    %c10_27 = arith.constant 10 : index
    %49 = memref.load %arg10[%c10_27] : memref<16xf32, #tpu.memory_space<smem>>
    %c11_28 = arith.constant 11 : index
    %50 = memref.load %arg10[%c11_28] : memref<16xf32, #tpu.memory_space<smem>>
    %c12_29 = arith.constant 12 : index
    %51 = memref.load %arg10[%c12_29] : memref<16xf32, #tpu.memory_space<smem>>
    %c13_30 = arith.constant 13 : index
    %52 = memref.load %arg10[%c13_30] : memref<16xf32, #tpu.memory_space<smem>>
    %c14_31 = arith.constant 14 : index
    %53 = memref.load %arg10[%c14_31] : memref<16xf32, #tpu.memory_space<smem>>
    %c15_32 = arith.constant 15 : index
    %54 = memref.load %arg10[%c15_32] : memref<16xf32, #tpu.memory_space<smem>>
    %c0_33 = arith.constant 0 : index
    %55 = memref.load %arg11[%c0_33] : memref<16xf32, #tpu.memory_space<smem>>
    %c1_34 = arith.constant 1 : index
    %56 = memref.load %arg11[%c1_34] : memref<16xf32, #tpu.memory_space<smem>>
    %c2_35 = arith.constant 2 : index
    %57 = memref.load %arg11[%c2_35] : memref<16xf32, #tpu.memory_space<smem>>
    %c3_36 = arith.constant 3 : index
    %58 = memref.load %arg11[%c3_36] : memref<16xf32, #tpu.memory_space<smem>>
    %c4_37 = arith.constant 4 : index
    %59 = memref.load %arg11[%c4_37] : memref<16xf32, #tpu.memory_space<smem>>
    %c5_38 = arith.constant 5 : index
    %60 = memref.load %arg11[%c5_38] : memref<16xf32, #tpu.memory_space<smem>>
    %c6_39 = arith.constant 6 : index
    %61 = memref.load %arg11[%c6_39] : memref<16xf32, #tpu.memory_space<smem>>
    %c7_40 = arith.constant 7 : index
    %62 = memref.load %arg11[%c7_40] : memref<16xf32, #tpu.memory_space<smem>>
    %c8_41 = arith.constant 8 : index
    %63 = memref.load %arg11[%c8_41] : memref<16xf32, #tpu.memory_space<smem>>
    %c9_42 = arith.constant 9 : index
    %64 = memref.load %arg11[%c9_42] : memref<16xf32, #tpu.memory_space<smem>>
    %c10_43 = arith.constant 10 : index
    %65 = memref.load %arg11[%c10_43] : memref<16xf32, #tpu.memory_space<smem>>
    %c11_44 = arith.constant 11 : index
    %66 = memref.load %arg11[%c11_44] : memref<16xf32, #tpu.memory_space<smem>>
    %c12_45 = arith.constant 12 : index
    %67 = memref.load %arg11[%c12_45] : memref<16xf32, #tpu.memory_space<smem>>
    %c13_46 = arith.constant 13 : index
    %68 = memref.load %arg11[%c13_46] : memref<16xf32, #tpu.memory_space<smem>>
    %c14_47 = arith.constant 14 : index
    %69 = memref.load %arg11[%c14_47] : memref<16xf32, #tpu.memory_space<smem>>
    %c15_48 = arith.constant 15 : index
    %70 = memref.load %arg11[%c15_48] : memref<16xf32, #tpu.memory_space<smem>>
    %c0_49 = arith.constant 0 : index
    %71 = memref.load %arg12[%c0_49] : memref<1xf32, #tpu.memory_space<smem>>
    %c0_50 = arith.constant 0 : index
    %c0_51 = arith.constant 0 : index
    %c0_52 = arith.constant 0 : index
    %72 = vector.load %arg2[%c0_50, %c0_51, %c0_52] : memref<1x1x128xf32, #tpu.memory_space<vmem>>, vector<1x1x128xf32>
    %73 = vector.shape_cast %72 : vector<1x1x128xf32> to vector<1x128xf32>
    %c0_53 = arith.constant 0 : index
    %c0_54 = arith.constant 0 : index
    %c0_55 = arith.constant 0 : index
    %74 = vector.load %arg3[%c0_53, %c0_54, %c0_55] : memref<1x1x128xf32, #tpu.memory_space<vmem>>, vector<1x1x128xf32>
    %75 = vector.shape_cast %74 : vector<1x1x128xf32> to vector<1x128xf32>
    %c0_56 = arith.constant 0 : index
    %c0_57 = arith.constant 0 : index
    %c0_58 = arith.constant 0 : index
    %76 = vector.load %arg4[%c0_56, %c0_57, %c0_58] : memref<1x1x128xf32, #tpu.memory_space<vmem>>, vector<1x1x128xf32>
    %77 = vector.shape_cast %76 : vector<1x1x128xf32> to vector<1x128xf32>
    %c0_59 = arith.constant 0 : index
    %c0_60 = arith.constant 0 : index
    %c0_61 = arith.constant 0 : index
    %78 = vector.load %arg5[%c0_59, %c0_60, %c0_61] : memref<1x1x128xf32, #tpu.memory_space<vmem>>, vector<1x1x128xf32>
    %79 = vector.shape_cast %78 : vector<1x1x128xf32> to vector<1x128xf32>
    %80 = vector.broadcast %4 : f32 to vector<1x128xf32>
    %81 = arith.mulf %80, %73 : vector<1x128xf32>
    %82 = vector.broadcast %6 : f32 to vector<1x128xf32>
    %83 = arith.mulf %82, %75 : vector<1x128xf32>
    %84 = arith.addf %81, %83 : vector<1x128xf32>
    %85 = arith.mulf %79, %73 : vector<1x128xf32>
    %86 = vector.broadcast %7 : f32 to vector<1x128xf32>
    %87 = arith.mulf %86, %85 : vector<1x128xf32>
    %88 = vector.broadcast %23 : f32 to vector<1x128xf32>
    %89 = arith.mulf %88, %84 : vector<1x128xf32>
    %90 = arith.addf %87, %89 : vector<1x128xf32>
    %91 = vector.broadcast %39 : f32 to vector<1x128xf32>
    %92 = arith.addf %90, %91 : vector<1x128xf32>
    %cst = arith.constant 0.000000e+00 : f32
    %93 = vector.broadcast %cst : f32 to vector<1x128xf32>
    %94 = arith.maximumf %92, %93 : vector<1x128xf32>
    %95 = vector.broadcast %55 : f32 to vector<1x128xf32>
    %96 = arith.mulf %95, %94 : vector<1x128xf32>
    %97 = vector.broadcast %8 : f32 to vector<1x128xf32>
    %98 = arith.mulf %97, %85 : vector<1x128xf32>
    %99 = vector.broadcast %24 : f32 to vector<1x128xf32>
    %100 = arith.mulf %99, %84 : vector<1x128xf32>
    %101 = arith.addf %98, %100 : vector<1x128xf32>
    %102 = vector.broadcast %40 : f32 to vector<1x128xf32>
    %103 = arith.addf %101, %102 : vector<1x128xf32>
    %cst_62 = arith.constant 0.000000e+00 : f32
    %104 = vector.broadcast %cst_62 : f32 to vector<1x128xf32>
    %105 = arith.maximumf %103, %104 : vector<1x128xf32>
    %106 = vector.broadcast %56 : f32 to vector<1x128xf32>
    %107 = arith.mulf %106, %105 : vector<1x128xf32>
    %108 = arith.addf %96, %107 : vector<1x128xf32>
    %109 = vector.broadcast %9 : f32 to vector<1x128xf32>
    %110 = arith.mulf %109, %85 : vector<1x128xf32>
    %111 = vector.broadcast %25 : f32 to vector<1x128xf32>
    %112 = arith.mulf %111, %84 : vector<1x128xf32>
    %113 = arith.addf %110, %112 : vector<1x128xf32>
    %114 = vector.broadcast %41 : f32 to vector<1x128xf32>
    %115 = arith.addf %113, %114 : vector<1x128xf32>
    %cst_63 = arith.constant 0.000000e+00 : f32
    %116 = vector.broadcast %cst_63 : f32 to vector<1x128xf32>
    %117 = arith.maximumf %115, %116 : vector<1x128xf32>
    %118 = vector.broadcast %57 : f32 to vector<1x128xf32>
    %119 = arith.mulf %118, %117 : vector<1x128xf32>
    %120 = arith.addf %108, %119 : vector<1x128xf32>
    %121 = vector.broadcast %10 : f32 to vector<1x128xf32>
    %122 = arith.mulf %121, %85 : vector<1x128xf32>
    %123 = vector.broadcast %26 : f32 to vector<1x128xf32>
    %124 = arith.mulf %123, %84 : vector<1x128xf32>
    %125 = arith.addf %122, %124 : vector<1x128xf32>
    %126 = vector.broadcast %42 : f32 to vector<1x128xf32>
    %127 = arith.addf %125, %126 : vector<1x128xf32>
    %cst_64 = arith.constant 0.000000e+00 : f32
    %128 = vector.broadcast %cst_64 : f32 to vector<1x128xf32>
    %129 = arith.maximumf %127, %128 : vector<1x128xf32>
    %130 = vector.broadcast %58 : f32 to vector<1x128xf32>
    %131 = arith.mulf %130, %129 : vector<1x128xf32>
    %132 = arith.addf %120, %131 : vector<1x128xf32>
    %133 = vector.broadcast %11 : f32 to vector<1x128xf32>
    %134 = arith.mulf %133, %85 : vector<1x128xf32>
    %135 = vector.broadcast %27 : f32 to vector<1x128xf32>
    %136 = arith.mulf %135, %84 : vector<1x128xf32>
    %137 = arith.addf %134, %136 : vector<1x128xf32>
    %138 = vector.broadcast %43 : f32 to vector<1x128xf32>
    %139 = arith.addf %137, %138 : vector<1x128xf32>
    %cst_65 = arith.constant 0.000000e+00 : f32
    %140 = vector.broadcast %cst_65 : f32 to vector<1x128xf32>
    %141 = arith.maximumf %139, %140 : vector<1x128xf32>
    %142 = vector.broadcast %59 : f32 to vector<1x128xf32>
    %143 = arith.mulf %142, %141 : vector<1x128xf32>
    %144 = arith.addf %132, %143 : vector<1x128xf32>
    %145 = vector.broadcast %12 : f32 to vector<1x128xf32>
    %146 = arith.mulf %145, %85 : vector<1x128xf32>
    %147 = vector.broadcast %28 : f32 to vector<1x128xf32>
    %148 = arith.mulf %147, %84 : vector<1x128xf32>
    %149 = arith.addf %146, %148 : vector<1x128xf32>
    %150 = vector.broadcast %44 : f32 to vector<1x128xf32>
    %151 = arith.addf %149, %150 : vector<1x128xf32>
    %cst_66 = arith.constant 0.000000e+00 : f32
    %152 = vector.broadcast %cst_66 : f32 to vector<1x128xf32>
    %153 = arith.maximumf %151, %152 : vector<1x128xf32>
    %154 = vector.broadcast %60 : f32 to vector<1x128xf32>
    %155 = arith.mulf %154, %153 : vector<1x128xf32>
    %156 = arith.addf %144, %155 : vector<1x128xf32>
    %157 = vector.broadcast %13 : f32 to vector<1x128xf32>
    %158 = arith.mulf %157, %85 : vector<1x128xf32>
    %159 = vector.broadcast %29 : f32 to vector<1x128xf32>
    %160 = arith.mulf %159, %84 : vector<1x128xf32>
    %161 = arith.addf %158, %160 : vector<1x128xf32>
    %162 = vector.broadcast %45 : f32 to vector<1x128xf32>
    %163 = arith.addf %161, %162 : vector<1x128xf32>
    %cst_67 = arith.constant 0.000000e+00 : f32
    %164 = vector.broadcast %cst_67 : f32 to vector<1x128xf32>
    %165 = arith.maximumf %163, %164 : vector<1x128xf32>
    %166 = vector.broadcast %61 : f32 to vector<1x128xf32>
    %167 = arith.mulf %166, %165 : vector<1x128xf32>
    %168 = arith.addf %156, %167 : vector<1x128xf32>
    %169 = vector.broadcast %14 : f32 to vector<1x128xf32>
    %170 = arith.mulf %169, %85 : vector<1x128xf32>
    %171 = vector.broadcast %30 : f32 to vector<1x128xf32>
    %172 = arith.mulf %171, %84 : vector<1x128xf32>
    %173 = arith.addf %170, %172 : vector<1x128xf32>
    %174 = vector.broadcast %46 : f32 to vector<1x128xf32>
    %175 = arith.addf %173, %174 : vector<1x128xf32>
    %cst_68 = arith.constant 0.000000e+00 : f32
    %176 = vector.broadcast %cst_68 : f32 to vector<1x128xf32>
    %177 = arith.maximumf %175, %176 : vector<1x128xf32>
    %178 = vector.broadcast %62 : f32 to vector<1x128xf32>
    %179 = arith.mulf %178, %177 : vector<1x128xf32>
    %180 = arith.addf %168, %179 : vector<1x128xf32>
    %181 = vector.broadcast %15 : f32 to vector<1x128xf32>
    %182 = arith.mulf %181, %85 : vector<1x128xf32>
    %183 = vector.broadcast %31 : f32 to vector<1x128xf32>
    %184 = arith.mulf %183, %84 : vector<1x128xf32>
    %185 = arith.addf %182, %184 : vector<1x128xf32>
    %186 = vector.broadcast %47 : f32 to vector<1x128xf32>
    %187 = arith.addf %185, %186 : vector<1x128xf32>
    %cst_69 = arith.constant 0.000000e+00 : f32
    %188 = vector.broadcast %cst_69 : f32 to vector<1x128xf32>
    %189 = arith.maximumf %187, %188 : vector<1x128xf32>
    %190 = vector.broadcast %63 : f32 to vector<1x128xf32>
    %191 = arith.mulf %190, %189 : vector<1x128xf32>
    %192 = arith.addf %180, %191 : vector<1x128xf32>
    %193 = vector.broadcast %16 : f32 to vector<1x128xf32>
    %194 = arith.mulf %193, %85 : vector<1x128xf32>
    %195 = vector.broadcast %32 : f32 to vector<1x128xf32>
    %196 = arith.mulf %195, %84 : vector<1x128xf32>
    %197 = arith.addf %194, %196 : vector<1x128xf32>
    %198 = vector.broadcast %48 : f32 to vector<1x128xf32>
    %199 = arith.addf %197, %198 : vector<1x128xf32>
    %cst_70 = arith.constant 0.000000e+00 : f32
    %200 = vector.broadcast %cst_70 : f32 to vector<1x128xf32>
    %201 = arith.maximumf %199, %200 : vector<1x128xf32>
    %202 = vector.broadcast %64 : f32 to vector<1x128xf32>
    %203 = arith.mulf %202, %201 : vector<1x128xf32>
    %204 = arith.addf %192, %203 : vector<1x128xf32>
    %205 = vector.broadcast %17 : f32 to vector<1x128xf32>
    %206 = arith.mulf %205, %85 : vector<1x128xf32>
    %207 = vector.broadcast %33 : f32 to vector<1x128xf32>
    %208 = arith.mulf %207, %84 : vector<1x128xf32>
    %209 = arith.addf %206, %208 : vector<1x128xf32>
    %210 = vector.broadcast %49 : f32 to vector<1x128xf32>
    %211 = arith.addf %209, %210 : vector<1x128xf32>
    %cst_71 = arith.constant 0.000000e+00 : f32
    %212 = vector.broadcast %cst_71 : f32 to vector<1x128xf32>
    %213 = arith.maximumf %211, %212 : vector<1x128xf32>
    %214 = vector.broadcast %65 : f32 to vector<1x128xf32>
    %215 = arith.mulf %214, %213 : vector<1x128xf32>
    %216 = arith.addf %204, %215 : vector<1x128xf32>
    %217 = vector.broadcast %18 : f32 to vector<1x128xf32>
    %218 = arith.mulf %217, %85 : vector<1x128xf32>
    %219 = vector.broadcast %34 : f32 to vector<1x128xf32>
    %220 = arith.mulf %219, %84 : vector<1x128xf32>
    %221 = arith.addf %218, %220 : vector<1x128xf32>
    %222 = vector.broadcast %50 : f32 to vector<1x128xf32>
    %223 = arith.addf %221, %222 : vector<1x128xf32>
    %cst_72 = arith.constant 0.000000e+00 : f32
    %224 = vector.broadcast %cst_72 : f32 to vector<1x128xf32>
    %225 = arith.maximumf %223, %224 : vector<1x128xf32>
    %226 = vector.broadcast %66 : f32 to vector<1x128xf32>
    %227 = arith.mulf %226, %225 : vector<1x128xf32>
    %228 = arith.addf %216, %227 : vector<1x128xf32>
    %229 = vector.broadcast %19 : f32 to vector<1x128xf32>
    %230 = arith.mulf %229, %85 : vector<1x128xf32>
    %231 = vector.broadcast %35 : f32 to vector<1x128xf32>
    %232 = arith.mulf %231, %84 : vector<1x128xf32>
    %233 = arith.addf %230, %232 : vector<1x128xf32>
    %234 = vector.broadcast %51 : f32 to vector<1x128xf32>
    %235 = arith.addf %233, %234 : vector<1x128xf32>
    %cst_73 = arith.constant 0.000000e+00 : f32
    %236 = vector.broadcast %cst_73 : f32 to vector<1x128xf32>
    %237 = arith.maximumf %235, %236 : vector<1x128xf32>
    %238 = vector.broadcast %67 : f32 to vector<1x128xf32>
    %239 = arith.mulf %238, %237 : vector<1x128xf32>
    %240 = arith.addf %228, %239 : vector<1x128xf32>
    %241 = vector.broadcast %20 : f32 to vector<1x128xf32>
    %242 = arith.mulf %241, %85 : vector<1x128xf32>
    %243 = vector.broadcast %36 : f32 to vector<1x128xf32>
    %244 = arith.mulf %243, %84 : vector<1x128xf32>
    %245 = arith.addf %242, %244 : vector<1x128xf32>
    %246 = vector.broadcast %52 : f32 to vector<1x128xf32>
    %247 = arith.addf %245, %246 : vector<1x128xf32>
    %cst_74 = arith.constant 0.000000e+00 : f32
    %248 = vector.broadcast %cst_74 : f32 to vector<1x128xf32>
    %249 = arith.maximumf %247, %248 : vector<1x128xf32>
    %250 = vector.broadcast %68 : f32 to vector<1x128xf32>
    %251 = arith.mulf %250, %249 : vector<1x128xf32>
    %252 = arith.addf %240, %251 : vector<1x128xf32>
    %253 = vector.broadcast %21 : f32 to vector<1x128xf32>
    %254 = arith.mulf %253, %85 : vector<1x128xf32>
    %255 = vector.broadcast %37 : f32 to vector<1x128xf32>
    %256 = arith.mulf %255, %84 : vector<1x128xf32>
    %257 = arith.addf %254, %256 : vector<1x128xf32>
    %258 = vector.broadcast %53 : f32 to vector<1x128xf32>
    %259 = arith.addf %257, %258 : vector<1x128xf32>
    %cst_75 = arith.constant 0.000000e+00 : f32
    %260 = vector.broadcast %cst_75 : f32 to vector<1x128xf32>
    %261 = arith.maximumf %259, %260 : vector<1x128xf32>
    %262 = vector.broadcast %69 : f32 to vector<1x128xf32>
    %263 = arith.mulf %262, %261 : vector<1x128xf32>
    %264 = arith.addf %252, %263 : vector<1x128xf32>
    %265 = vector.broadcast %22 : f32 to vector<1x128xf32>
    %266 = arith.mulf %265, %85 : vector<1x128xf32>
    %267 = vector.broadcast %38 : f32 to vector<1x128xf32>
    %268 = arith.mulf %267, %84 : vector<1x128xf32>
    %269 = arith.addf %266, %268 : vector<1x128xf32>
    %270 = vector.broadcast %54 : f32 to vector<1x128xf32>
    %271 = arith.addf %269, %270 : vector<1x128xf32>
    %cst_76 = arith.constant 0.000000e+00 : f32
    %272 = vector.broadcast %cst_76 : f32 to vector<1x128xf32>
    %273 = arith.maximumf %271, %272 : vector<1x128xf32>
    %274 = vector.broadcast %70 : f32 to vector<1x128xf32>
    %275 = arith.mulf %274, %273 : vector<1x128xf32>
    %276 = arith.addf %264, %275 : vector<1x128xf32>
    %277 = arith.subf %77, %79 : vector<1x128xf32>
    %278 = arith.subf %75, %276 : vector<1x128xf32>
    %279 = vector.broadcast %71 : f32 to vector<1x128xf32>
    %280 = arith.subf %278, %279 : vector<1x128xf32>
    %281 = arith.mulf %280, %277 : vector<1x128xf32>
    %c0_77 = arith.constant 0 : index
    %c0_78 = arith.constant 0 : index
    %282 = vector.load %arg15[%c0_77, %c0_78] : memref<1x128xf32, #tpu.memory_space<vmem>>, vector<1x128xf32>
    %283 = arith.mulf %281, %281 : vector<1x128xf32>
    %284 = arith.addf %282, %283 : vector<1x128xf32>
    %c0_79 = arith.constant 0 : index
    %c0_80 = arith.constant 0 : index
    %285 = vector.load %arg15[%c0_79, %c0_80] : memref<1x128xf32, #tpu.memory_space<vmem>>, vector<1x128xf32>
    tpu.vector_store %arg15[%c0_79, %c0_80], %284 {strides = array<i32>} : memref<1x128xf32, #tpu.memory_space<vmem>>, vector<1x128xf32>,
    %c0_81 = arith.constant 0 : index
    %c0_82 = arith.constant 0 : index
    %286 = vector.load %arg16[%c0_81, %c0_82] : memref<1x128xf32, #tpu.memory_space<vmem>>, vector<1x128xf32>
    %287 = arith.addf %286, %277 : vector<1x128xf32>
    %c0_83 = arith.constant 0 : index
    %c0_84 = arith.constant 0 : index
    %288 = vector.load %arg16[%c0_83, %c0_84] : memref<1x128xf32, #tpu.memory_space<vmem>>, vector<1x128xf32>
    tpu.vector_store %arg16[%c0_83, %c0_84], %287 {strides = array<i32>} : memref<1x128xf32, #tpu.memory_space<vmem>>, vector<1x128xf32>,
    %c0_i32_85 = arith.constant 0 : i32
    %289 = arith.cmpi eq, %arg1, %c0_i32_85 : i32
    %290 = arith.extui %289 : i1 to i32
    %c0_i32_86 = arith.constant 0 : i32
    %291 = arith.cmpi ne, %290, %c0_i32_86 : i32
    scf.if %291 {
      %c0_87 = arith.constant 0 : index
      %c0_88 = arith.constant 0 : index
      %292 = vector.load %arg15[%c0_87, %c0_88] : memref<1x128xf32, #tpu.memory_space<vmem>>, vector<1x128xf32>
      %cst_89 = arith.constant dense<0.000000e+00> : vector<128xf32>
      %293 = vector.multi_reduction <add>, %292, %cst_89 [0] : vector<1x128xf32> to vector<128xf32>
      %294 = vector.shape_cast %293 : vector<128xf32> to vector<1x128xf32>
      %c0_90 = arith.constant 0 : index
      %c0_91 = arith.constant 0 : index
      %c0_92 = arith.constant 0 : index
      %295 = vector.load %arg13[%c0_90, %c0_91, %c0_92] : memref<1x1x128xf32, #tpu.memory_space<vmem>>, vector<1x1x128xf32>
      %296 = vector.shape_cast %295 : vector<1x1x128xf32> to vector<1x128xf32>
      %297 = vector.shape_cast %294 : vector<1x128xf32> to vector<1x1x128xf32>
      tpu.vector_store %arg13[%c0_90, %c0_91, %c0_92], %297 {strides = array<i32>} : memref<1x1x128xf32, #tpu.memory_space<vmem>>, vector<1x1x128xf32>,
      %c0_93 = arith.constant 0 : index
      %c0_94 = arith.constant 0 : index
      %298 = vector.load %arg16[%c0_93, %c0_94] : memref<1x128xf32, #tpu.memory_space<vmem>>, vector<1x128xf32>
      %cst_95 = arith.constant dense<0.000000e+00> : vector<128xf32>
      %299 = vector.multi_reduction <add>, %298, %cst_95 [0] : vector<1x128xf32> to vector<128xf32>
      %300 = vector.shape_cast %299 : vector<128xf32> to vector<1x128xf32>
      %c0_96 = arith.constant 0 : index
      %c0_97 = arith.constant 0 : index
      %c0_98 = arith.constant 0 : index
      %301 = vector.load %arg14[%c0_96, %c0_97, %c0_98] : memref<1x1x128xf32, #tpu.memory_space<vmem>>, vector<1x1x128xf32>
      %302 = vector.shape_cast %301 : vector<1x1x128xf32> to vector<1x128xf32>
      %303 = vector.shape_cast %300 : vector<1x128xf32> to vector<1x1x128xf32>
      tpu.vector_store %arg14[%c0_96, %c0_97, %c0_98], %303 {strides = array<i32>} : memref<1x1x128xf32, #tpu.memory_space<vmem>>, vector<1x1x128xf32>,
    } else {
    }
    return
  }
  func.func @transform_0(%arg0: i32, %arg1: i32) -> (i32, i32, i32) {
    %c0_i32 = arith.constant 0 : i32
    %c0_i32_0 = arith.constant 0 : i32
    return %arg0, %arg1, %c0_i32 : i32, i32, i32
  }
  func.func @transform_1(%arg0: i32, %arg1: i32) -> (i32, i32, i32) {
    %c0_i32 = arith.constant 0 : i32
    %c0_i32_0 = arith.constant 0 : i32
    return %arg0, %arg1, %c0_i32 : i32, i32, i32
  }
  func.func @transform_2(%arg0: i32, %arg1: i32) -> (i32, i32, i32) {
    %c0_i32 = arith.constant 0 : i32
    %c0_i32_0 = arith.constant 0 : i32
    return %arg0, %arg1, %c0_i32 : i32, i32, i32
  }
  func.func @transform_3(%arg0: i32, %arg1: i32) -> (i32, i32, i32) {
    %c0_i32 = arith.constant 0 : i32
    %c0_i32_0 = arith.constant 0 : i32
    return %arg0, %arg1, %c0_i32 : i32, i32, i32
  }
  func.func @transform_4(%arg0: i32, %arg1: i32) -> i32 {
    %c0_i32 = arith.constant 0 : i32
    %c0_i32_0 = arith.constant 0 : i32
    return %c0_i32 : i32
  }
  func.func @transform_5(%arg0: i32, %arg1: i32) -> i32 {
    %c0_i32 = arith.constant 0 : i32
    %c0_i32_0 = arith.constant 0 : i32
    return %c0_i32 : i32
  }
  func.func @transform_6(%arg0: i32, %arg1: i32) -> i32 {
    %c0_i32 = arith.constant 0 : i32
    %c0_i32_0 = arith.constant 0 : i32
    return %c0_i32 : i32
  }
  func.func @transform_7(%arg0: i32, %arg1: i32) -> i32 {
    %c0_i32 = arith.constant 0 : i32
    %c0_i32_0 = arith.constant 0 : i32
    return %c0_i32 : i32
  }
  func.func @transform_8(%arg0: i32, %arg1: i32) -> i32 {
    %c0_i32 = arith.constant 0 : i32
    %c0_i32_0 = arith.constant 0 : i32
    return %c0_i32 : i32
  }
  func.func @transform_9(%arg0: i32, %arg1: i32) -> i32 {
    %c0_i32 = arith.constant 0 : i32
    %c0_i32_0 = arith.constant 0 : i32
    return %c0_i32 : i32
  }
  func.func @transform_10(%arg0: i32, %arg1: i32) -> i32 {
    %c0_i32 = arith.constant 0 : i32
    %c0_i32_0 = arith.constant 0 : i32
    return %c0_i32 : i32
  }
  func.func @transform_11(%arg0: i32, %arg1: i32) -> (i32, i32, i32) {
    %c0_i32 = arith.constant 0 : i32
    %c0_i32_0 = arith.constant 0 : i32
    %c0_i32_1 = arith.constant 0 : i32
    return %arg0, %c0_i32, %c0_i32_0 : i32, i32, i32
  }
  func.func @transform_12(%arg0: i32, %arg1: i32) -> (i32, i32, i32) {
    %c0_i32 = arith.constant 0 : i32
    %c0_i32_0 = arith.constant 0 : i32
    %c0_i32_1 = arith.constant 0 : i32
    return %arg0, %c0_i32, %c0_i32_0 : i32, i32, i32
  }
}

</mosaic_0001>

<llo_original>
// kernel: tpu_custom_call.1
$region0: #{tpu_custom_call.1}
  #allocation0 [shape = 'u32[]', space=smem, size = 0x4, offset = 0x4, fixed_abs, tag = 'smem constant byte address 0x4 - core index']
  #allocation1 [shape = 'u32[144,128]{1,0:T(1,128)}', space=vmem, size = 0x12000, scoped, tag = 'internal scratch']
  #allocation2 [shape = 'f32[1,128]{1,0:T(1,128)}', space=vmem, size = 0x200, scoped, tag = 'scratch operand']
  #allocation3 [shape = 'f32[1,128]{1,0:T(1,128)}', space=vmem, size = 0x200, scoped, tag = 'scratch operand']
  #allocation4 [shape = 'f32[1]{0:T(128)S(6)}', space=smem, size = 0x200, scoped, tag = 'scoped memory for tpu_custom_call.1']
  %s0 = inlined_call_operand.vmem [shape: f32[2,1,128], index: 0, kind: input, shape index: {}]
  %s1 = inlined_call_operand.hbm [shape: f32[2,1,128], index: 1, kind: input, shape index: {}]
  %s2 = inlined_call_operand.vmem [shape: f32[2,1,128], index: 2, kind: input, shape index: {}]
  %s3 = inlined_call_operand.vmem [shape: f32[2,1,128], index: 3, kind: input, shape index: {}]
  %s4 = inlined_call_operand.vmem [shape: f32[2], index: 4, kind: input, shape index: {}]
  %s5 = inlined_call_operand.vmem [shape: f32[2], index: 5, kind: input, shape index: {}]
  %s6 = inlined_call_operand.vmem [shape: f32[16], index: 6, kind: input, shape index: {}]
  %s7 = inlined_call_operand.vmem [shape: f32[16], index: 7, kind: input, shape index: {}]
  %s8 = inlined_call_operand.vmem [shape: f32[16], index: 8, kind: input, shape index: {}]
  %s9 = inlined_call_operand.vmem [shape: f32[16], index: 9, kind: input, shape index: {}]
  %s10 = inlined_call_operand.<no memory space> [shape: f32[1], index: 10, kind: input, shape index: {}]
  %s11 = inlined_call_operand.hbm [shape: f32[2,1,128], index: 11, kind: output, shape index: {0}]
  %s12 = inlined_call_operand.hbm [shape: f32[2,1,128], index: 12, kind: output, shape index: {1}]
  %13 = xla_tuple %s11, %s12
  %s14 = sld [smem:[#allocation0]]
  $region121: #{tpu_custom_call.1} parent=0
    _
  %s16 = ssub.s32 1, %s14
  %s17 = scalar_select 0, %s16, %s14
  %18 = sst [smem:[#allocation4]] %s10
  $region1: #{tpu_custom_call.1} parent=0
    #allocation5 [shape = 'u8[1024]{0}', space=vmem, size = 0x400, scoped, tag = 'input window, operand 1']
    #allocation6 [shape = 's32[2]{0}', space=sflag, size = 0x8, scoped, tag = 'scoped memory for tpu_custom_call.1']
    #allocation7 [shape = 's32[2]{0}', space=sflag, size = 0x8, scoped, tag = 'scoped memory for tpu_custom_call.1']
    #allocation8 [shape = 's32[2]{0}', space=sflag, size = 0x8, scoped, tag = 'scoped memory for tpu_custom_call.1']
    #allocation9 [shape = 'u8[512]{0}', space=smem, size = 0x200, scoped, tag = 'input window, operand 4, single buffered']
    #allocation10 [shape = 'u8[512]{0}', space=smem, size = 0x200, scoped, tag = 'input window, operand 5, single buffered']
    #allocation11 [shape = 's32[1]{0}', space=sflag, size = 0x4, scoped, tag = 'scoped memory for tpu_custom_call.1']
    #allocation12 [shape = 'u8[512]{0}', space=smem, size = 0x200, scoped, tag = 'input window, operand 6, single buffered']
    #allocation13 [shape = 'u8[512]{0}', space=smem, size = 0x200, scoped, tag = 'input window, operand 7, single buffered']
    #allocation14 [shape = 's32[1]{0}', space=sflag, size = 0x4, scoped, tag = 'scoped memory for tpu_custom_call.1']
    #allocation15 [shape = 'u8[512]{0}', space=smem, size = 0x200, scoped, tag = 'input window, operand 8, single buffered']
    #allocation16 [shape = 'u8[512]{0}', space=smem, size = 0x200, scoped, tag = 'input window, operand 9, single buffered']
    #allocation17 [shape = 's32[1]{0}', space=sflag, size = 0x4, scoped, tag = 'scoped memory for tpu_custom_call.1']
    #allocation18 [shape = 'u8[1024]{0}', space=vmem, size = 0x400, scoped, tag = 'output window, operand 0']
    #allocation19 [shape = 'u8[1024]{0}', space=vmem, size = 0x400, scoped, tag = 'output window, operand 1']
    #allocation20 [shape = 's32[2]{0}', space=sflag, size = 0x8, scoped, tag = 'scoped memory for tpu_custom_call.1']
    %19 = vsyncpa [#allocation6], 0
    %s20 = scalar_lea.sflag [#allocation6], 1
    %21 = vsyncpa %s20, 0
    %22 = vsyncpa [#allocation8], 0
    %23 = vsyncpa [#allocation11], 0
    %24 = vsyncpa [#allocation14], 0
    %25 = vsyncpa [#allocation17], 0
    %26 = vsyncpa [#allocation7], 0
    %s27 = scalar_lea.sflag [#allocation7], 1
    %28 = vsyncpa %s27, 0
    %29 = vsyncpa [#allocation20], 0
    %s30 = scalar_lea.sflag [#allocation20], 1
    %31 = vsyncpa %s30, 0
    loop: start=0, step=1, limit=4
    $region2: #{tpu_custom_call.1} parent=1 // loop_pre_header
      _
    $region3: #{tpu_custom_call.1} parent=1 // loop_header
      %s33 = sphi 0, %s37
      %p34 = scmp.ge.s32.totalorder %s33, 4
      %s40 = sphi 0, %s52
      %s41 = sphi 0, %s48
      %s42 = sphi 0, %s40
      %s43 = sphi 0, %s41
      %s44 = sphi 0, %s42
      %s45 = sphi 0, %s43
      %s57 = sphi 0, %s59
      %s60 = sphi 0, %s57
      %s61 = sphi 0, %s60
      %s77 = sphi 0, %s61
      %s85 = sphi 0, %s87
      %s88 = sphi 0, %s85
      %s89 = sphi 0, %s88
      %s105 = sphi 0, %s89
      %s113 = sphi 0, %s115
      %s116 = sphi 0, %s113
      %s117 = sphi 0, %s116
      %s133 = sphi 0, %s117
      %s141 = sphi 0, %s143
      %s144 = sphi 0, %s141
      %s145 = sphi 0, %s144
      %s161 = sphi 0, %s145
      %s165 = sphi 0, %s165
      %s167 = sphi 0, %s165
      %s168 = sphi 0, %s167
      %s182 = sphi 0, %s168
      %s186 = sphi 0, %s186
      %s188 = sphi 0, %s186
      %s189 = sphi 0, %s188
      %s203 = sphi 0, %s189
      %s207 = sphi 0, %s207
      %s209 = sphi 0, %s207
      %s210 = sphi 0, %s209
      %s224 = sphi 0, %s210
      %s228 = sphi 0, %s228
      %s230 = sphi 0, %s228
      %s231 = sphi 0, %s230
      %s245 = sphi 0, %s231
      %s249 = sphi 0, %s249
      %s251 = sphi 0, %s249
      %s252 = sphi 0, %s251
      %s266 = sphi 0, %s252
      %s270 = sphi 0, %s270
      %s272 = sphi 0, %s270
      %s273 = sphi 0, %s272
      %s287 = sphi 0, %s273
      %s291 = sphi 0, %s291
      %s293 = sphi 0, %s291
      %s294 = sphi 0, %s293
      %s308 = sphi 0, %s294
      %s314 = sphi 0, %s316
      %s317 = sphi 0, %s314
      %s318 = sphi 0, %s317
      %s334 = sphi 0, %s318
      %s340 = sphi 0, %s342
      %s343 = sphi 0, %s340
      %s344 = sphi 0, %s343
      %s360 = sphi 0, %s344
    $region4: #{tpu_custom_call.1} parent=1 // loop_header_branch
      %36 = sbr.rel (%p34) target = $region8
    $region5: #{tpu_custom_call.1} parent=1 // loop_body
      %s38 = ssub.s32 %s33, 1
      %s39 = ssub.s32 %s33, 2
      %s46 = sadd.s32 1, %s41
      %p47 = scmp.ge.s32.totalorder %s46, 1
      %s48 = scalar_select %p47, 0, %s46
      %s49 = sadd.s32 1, %s40
      %s50 = scalar_select %p47, %s49, %s40
      %p51 = scmp.ge.s32.totalorder %s50, 2
      %s52 = scalar_select %p51, 0, %s50
      %s53 = ssub.s32 %s40, %s52
      %s54 = ssub.s32 %s41, %s48
      %s55 = sor.u32 %s53, %s54
      %p56 = scmp.eq.s32.totalorder %s55, 0
      %s58 = sadd.s32 %s57, 1
      %s59 = scalar_select %p56, %s57, %s58
      %p62 = pneg %p56
      %p63 = scmp.eq.s32.totalorder %s33, 1
      %p64 = por %p62, %p63
      %p65 = scmp.ne.s32.totalorder %s57, %s60
      %p66 = scmp.eq.s32.totalorder %s33, 0
      %p67 = por %p65, %p66
      %p68 = scmp.ne.s32.totalorder %s57, %s60
      %p69 = scmp.eq.s32.totalorder %s38, 1
      %p70 = por %p68, %p69
      %p71 = scmp.ne.s32.totalorder %s60, %s61
      %p72 = scmp.eq.s32.totalorder %s38, 0
      %p73 = por %p71, %p72
      %p74 = scmp.ne.s32.totalorder %s60, %s61
      %p75 = scmp.eq.s32.totalorder %s39, 1
      %p76 = por %p74, %p75
      %p78 = scmp.ne.s32.totalorder %s61, %s77
      %p79 = scmp.eq.s32.totalorder %s39, 0
      %p80 = por %p78, %p79
      %s81 = ssub.s32 %s40, %s52
      %s82 = ssub.s32 %s41, %s48
      %s83 = sor.u32 %s81, %s82
      %p84 = scmp.eq.s32.totalorder %s83, 0
      %s86 = sadd.s32 %s85, 1
      %s87 = scalar_select %p84, %s85, %s86
      %p90 = pneg %p84
      %p91 = scmp.eq.s32.totalorder %s33, 1
      %p92 = por %p90, %p91
      %p93 = scmp.ne.s32.totalorder %s85, %s88
      %p94 = scmp.eq.s32.totalorder %s33, 0
      %p95 = por %p93, %p94
      %p96 = scmp.ne.s32.totalorder %s85, %s88
      %p97 = scmp.eq.s32.totalorder %s38, 1
      %p98 = por %p96, %p97
      %p99 = scmp.ne.s32.totalorder %s88, %s89
      %p100 = scmp.eq.s32.totalorder %s38, 0
      %p101 = por %p99, %p100
      %p102 = scmp.ne.s32.totalorder %s88, %s89
      %p103 = scmp.eq.s32.totalorder %s39, 1
      %p104 = por %p102, %p103
      %p106 = scmp.ne.s32.totalorder %s89, %s105
      %p107 = scmp.eq.s32.totalorder %s39, 0
      %p108 = por %p106, %p107
      %s109 = ssub.s32 %s40, %s52
      %s110 = ssub.s32 %s41, %s48
      %s111 = sor.u32 %s109, %s110
      %p112 = scmp.eq.s32.totalorder %s111, 0
      %s114 = sadd.s32 %s113, 1
      %s115 = scalar_select %p112, %s113, %s114
      %p118 = pneg %p112
      %p119 = scmp.eq.s32.totalorder %s33, 1
      %p120 = por %p118, %p119
      %p121 = scmp.ne.s32.totalorder %s113, %s116
      %p122 = scmp.eq.s32.totalorder %s33, 0
      %p123 = por %p121, %p122
      %p124 = scmp.ne.s32.totalorder %s113, %s116
      %p125 = scmp.eq.s32.totalorder %s38, 1
      %p126 = por %p124, %p125
      %p127 = scmp.ne.s32.totalorder %s116, %s117
      %p128 = scmp.eq.s32.totalorder %s38, 0
      %p129 = por %p127, %p128
      %p130 = scmp.ne.s32.totalorder %s116, %s117
      %p131 = scmp.eq.s32.totalorder %s39, 1
      %p132 = por %p130, %p131
      %p134 = scmp.ne.s32.totalorder %s117, %s133
      %p135 = scmp.eq.s32.totalorder %s39, 0
      %p136 = por %p134, %p135
      %s137 = ssub.s32 %s40, %s52
      %s138 = ssub.s32 %s41, %s48
      %s139 = sor.u32 %s137, %s138
      %p140 = scmp.eq.s32.totalorder %s139, 0
      %s142 = sadd.s32 %s141, 1
      %s143 = scalar_select %p140, %s141, %s142
      %p146 = pneg %p140
      %p147 = scmp.eq.s32.totalorder %s33, 1
      %p148 = por %p146, %p147
      %p149 = scmp.ne.s32.totalorder %s141, %s144
      %p150 = scmp.eq.s32.totalorder %s33, 0
      %p151 = por %p149, %p150
      %p152 = scmp.ne.s32.totalorder %s141, %s144
      %p153 = scmp.eq.s32.totalorder %s38, 1
      %p154 = por %p152, %p153
      %p155 = scmp.ne.s32.totalorder %s144, %s145
      %p156 = scmp.eq.s32.totalorder %s38, 0
      %p157 = por %p155, %p156
      %p158 = scmp.ne.s32.totalorder %s144, %s145
      %p159 = scmp.eq.s32.totalorder %s39, 1
      %p160 = por %p158, %p159
      %p162 = scmp.ne.s32.totalorder %s145, %s161
      %p163 = scmp.eq.s32.totalorder %s39, 0
      %p164 = por %p162, %p163
      %s166 = sadd.s32 %s165, 1
      %p169 = scmp.eq.s32.totalorder %s33, 1
      %p170 = scmp.ne.s32.totalorder %s165, %s167
      %p171 = scmp.eq.s32.totalorder %s33, 0
      %p172 = por %p170, %p171
      %p173 = scmp.ne.s32.totalorder %s165, %s167
      %p174 = scmp.eq.s32.totalorder %s38, 1
      %p175 = por %p173, %p174
      %p176 = scmp.ne.s32.totalorder %s167, %s168
      %p177 = scmp.eq.s32.totalorder %s38, 0
      %p178 = por %p176, %p177
      %p179 = scmp.ne.s32.totalorder %s167, %s168
      %p180 = scmp.eq.s32.totalorder %s39, 1
      %p181 = por %p179, %p180
      %p183 = scmp.ne.s32.totalorder %s168, %s182
      %p184 = scmp.eq.s32.totalorder %s39, 0
      %p185 = por %p183, %p184
      %s187 = sadd.s32 %s186, 1
      %p190 = scmp.eq.s32.totalorder %s33, 1
      %p191 = scmp.ne.s32.totalorder %s186, %s188
      %p192 = scmp.eq.s32.totalorder %s33, 0
      %p193 = por %p191, %p192
      %p194 = scmp.ne.s32.totalorder %s186, %s188
      %p195 = scmp.eq.s32.totalorder %s38, 1
      %p196 = por %p194, %p195
      %p197 = scmp.ne.s32.totalorder %s188, %s189
      %p198 = scmp.eq.s32.totalorder %s38, 0
      %p199 = por %p197, %p198
      %p200 = scmp.ne.s32.totalorder %s188, %s189
      %p201 = scmp.eq.s32.totalorder %s39, 1
      %p202 = por %p200, %p201
      %p204 = scmp.ne.s32.totalorder %s189, %s203
      %p205 = scmp.eq.s32.totalorder %s39, 0
      %p206 = por %p204, %p205
      %s208 = sadd.s32 %s207, 1
      %p211 = scmp.eq.s32.totalorder %s33, 1
      %p212 = scmp.ne.s32.totalorder %s207, %s209
      %p213 = scmp.eq.s32.totalorder %s33, 0
      %p214 = por %p212, %p213
      %p215 = scmp.ne.s32.totalorder %s207, %s209
      %p216 = scmp.eq.s32.totalorder %s38, 1
      %p217 = por %p215, %p216
      %p218 = scmp.ne.s32.totalorder %s209, %s210
      %p219 = scmp.eq.s32.totalorder %s38, 0
      %p220 = por %p218, %p219
      %p221 = scmp.ne.s32.totalorder %s209, %s210
      %p222 = scmp.eq.s32.totalorder %s39, 1
      %p223 = por %p221, %p222
      %p225 = scmp.ne.s32.totalorder %s210, %s224
      %p226 = scmp.eq.s32.totalorder %s39, 0
      %p227 = por %p225, %p226
      %s229 = sadd.s32 %s228, 1
      %p232 = scmp.eq.s32.totalorder %s33, 1
      %p233 = scmp.ne.s32.totalorder %s228, %s230
      %p234 = scmp.eq.s32.totalorder %s33, 0
      %p235 = por %p233, %p234
      %p236 = scmp.ne.s32.totalorder %s228, %s230
      %p237 = scmp.eq.s32.totalorder %s38, 1
      %p238 = por %p236, %p237
      %p239 = scmp.ne.s32.totalorder %s230, %s231
      %p240 = scmp.eq.s32.totalorder %s38, 0
      %p241 = por %p239, %p240
      %p242 = scmp.ne.s32.totalorder %s230, %s231
      %p243 = scmp.eq.s32.totalorder %s39, 1
      %p244 = por %p242, %p243
      %p246 = scmp.ne.s32.totalorder %s231, %s245
      %p247 = scmp.eq.s32.totalorder %s39, 0
      %p248 = por %p246, %p247
      %s250 = sadd.s32 %s249, 1
      %p253 = scmp.eq.s32.totalorder %s33, 1
      %p254 = scmp.ne.s32.totalorder %s249, %s251
      %p255 = scmp.eq.s32.totalorder %s33, 0
      %p256 = por %p254, %p255
      %p257 = scmp.ne.s32.totalorder %s249, %s251
      %p258 = scmp.eq.s32.totalorder %s38, 1
      %p259 = por %p257, %p258
      %p260 = scmp.ne.s32.totalorder %s251, %s252
      %p261 = scmp.eq.s32.totalorder %s38, 0
      %p262 = por %p260, %p261
      %p263 = scmp.ne.s32.totalorder %s251, %s252
      %p264 = scmp.eq.s32.totalorder %s39, 1
      %p265 = por %p263, %p264
      %p267 = scmp.ne.s32.totalorder %s252, %s266
      %p268 = scmp.eq.s32.totalorder %s39, 0
      %p269 = por %p267, %p268
      %s271 = sadd.s32 %s270, 1
      %p274 = scmp.eq.s32.totalorder %s33, 1
      %p275 = scmp.ne.s32.totalorder %s270, %s272
      %p276 = scmp.eq.s32.totalorder %s33, 0
      %p277 = por %p275, %p276
      %p278 = scmp.ne.s32.totalorder %s270, %s272
      %p279 = scmp.eq.s32.totalorder %s38, 1
      %p280 = por %p278, %p279
      %p281 = scmp.ne.s32.totalorder %s272, %s273
      %p282 = scmp.eq.s32.totalorder %s38, 0
      %p283 = por %p281, %p282
      %p284 = scmp.ne.s32.totalorder %s272, %s273
      %p285 = scmp.eq.s32.totalorder %s39, 1
      %p286 = por %p284, %p285
      %p288 = scmp.ne.s32.totalorder %s273, %s287
      %p289 = scmp.eq.s32.totalorder %s39, 0
      %p290 = por %p288, %p289
      %s292 = sadd.s32 %s291, 1
      %p295 = scmp.eq.s32.totalorder %s33, 1
      %p296 = scmp.ne.s32.totalorder %s291, %s293
      %p297 = scmp.eq.s32.totalorder %s33, 0
      %p298 = por %p296, %p297
      %p299 = scmp.ne.s32.totalorder %s291, %s293
      %p300 = scmp.eq.s32.totalorder %s38, 1
      %p301 = por %p299, %p300
      %p302 = scmp.ne.s32.totalorder %s293, %s294
      %p303 = scmp.eq.s32.totalorder %s38, 0
      %p304 = por %p302, %p303
      %p305 = scmp.ne.s32.totalorder %s293, %s294
      %p306 = scmp.eq.s32.totalorder %s39, 1
      %p307 = por %p305, %p306
      %p309 = scmp.ne.s32.totalorder %s294, %s308
      %p310 = scmp.eq.s32.totalorder %s39, 0
      %p311 = por %p309, %p310
      %s312 = ssub.s32 %s40, %s52
      %p313 = scmp.eq.s32.totalorder %s312, 0
      %s315 = sadd.s32 %s314, 1
      %s316 = scalar_select %p313, %s314, %s315
      %p319 = pneg %p313
      %p320 = scmp.eq.s32.totalorder %s33, 1
      %p321 = por %p319, %p320
      %p322 = scmp.ne.s32.totalorder %s314, %s317
      %p323 = scmp.eq.s32.totalorder %s33, 0
      %p324 = por %p322, %p323
      %p325 = scmp.ne.s32.totalorder %s314, %s317
      %p326 = scmp.eq.s32.totalorder %s38, 1
      %p327 = por %p325, %p326
      %p328 = scmp.ne.s32.totalorder %s317, %s318
      %p329 = scmp.eq.s32.totalorder %s38, 0
      %p330 = por %p328, %p329
      %p331 = scmp.ne.s32.totalorder %s317, %s318
      %p332 = scmp.eq.s32.totalorder %s39, 1
      %p333 = por %p331, %p332
      %p335 = scmp.ne.s32.totalorder %s318, %s334
      %p336 = scmp.eq.s32.totalorder %s39, 0
      %p337 = por %p335, %p336
      %s338 = ssub.s32 %s40, %s52
      %p339 = scmp.eq.s32.totalorder %s338, 0
      %s341 = sadd.s32 %s340, 1
      %s342 = scalar_select %p339, %s340, %s341
      %p345 = pneg %p339
      %p346 = scmp.eq.s32.totalorder %s33, 1
      %p347 = por %p345, %p346
      %p348 = scmp.ne.s32.totalorder %s340, %s343
      %p349 = scmp.eq.s32.totalorder %s33, 0
      %p350 = por %p348, %p349
      %p351 = scmp.ne.s32.totalorder %s340, %s343
      %p352 = scmp.eq.s32.totalorder %s38, 1
      %p353 = por %p351, %p352
      %p354 = scmp.ne.s32.totalorder %s343, %s344
      %p355 = scmp.eq.s32.totalorder %s38, 0
      %p356 = por %p354, %p355
      %p357 = scmp.ne.s32.totalorder %s343, %s344
      %p358 = scmp.eq.s32.totalorder %s39, 1
      %p359 = por %p357, %p358
      %p361 = scmp.ne.s32.totalorder %s344, %s360
      %p362 = scmp.eq.s32.totalorder %s39, 0
      %p363 = por %p361, %p362
      %p364 = scmp.le.s32.totalorder 1, %s33
      %p365 = scmp.lt.s32.totalorder %s33, 3
      %p366 = pnand %p364, %p365
      %p367 = pneg %p366
      // Predicated region
      $region9: #{tpu_custom_call.1} parent=5 // pred_check
        _
      $region10: #{tpu_custom_call.1} parent=5 // pred_check_branch
        %369 = sbr.rel (%p366) target = $region12
      $region11: #{tpu_custom_call.1} parent=5 // pred_region
        %s370 = ssub.s32 %s33, 1
        // Predicated region
        $region13: #{tpu_custom_call.1} parent=11 // pred_check
          %p371 = pneg %p178
        $region14: #{tpu_custom_call.1} parent=11 // pred_check_branch
          %373 = sbr.rel (%p371) target = $region16
        $region15: #{tpu_custom_call.1} parent=11 // pred_region
          %s375 = ssub.s32 16, 16
          %376 = vsyncadd [#allocation8], %s375
          %s378 = sshll.u32 %s4, 4
          %s379 = int_to_ptr.vmem [resolvable:$true] %s378
          %381 = dma.vmem_to_smem %s379, 16, [#allocation9], [#allocation8]
        $region16: #{tpu_custom_call.1} parent=11 // pred_fallthru
          _
        // Predicated region
        $region17: #{tpu_custom_call.1} parent=11 // pred_check
          %p382 = pneg %p199
        $region18: #{tpu_custom_call.1} parent=11 // pred_check_branch
          %384 = sbr.rel (%p382) target = $region20
        $region19: #{tpu_custom_call.1} parent=11 // pred_region
          %s386 = ssub.s32 16, 16
          %387 = vsyncadd [#allocation11], %s386
          %s389 = sshll.u32 %s5, 4
          %s390 = int_to_ptr.vmem [resolvable:$true] %s389
          %392 = dma.vmem_to_smem %s390, 16, [#allocation10], [#allocation11]
        $region20: #{tpu_custom_call.1} parent=11 // pred_fallthru
          _
        // Predicated region
        $region21: #{tpu_custom_call.1} parent=11 // pred_check
          %p393 = pneg %p220
        $region22: #{tpu_custom_call.1} parent=11 // pred_check_branch
          %395 = sbr.rel (%p393) target = $region24
        $region23: #{tpu_custom_call.1} parent=11 // pred_region
          %s397 = ssub.s32 16, 16
          %398 = vsyncadd [#allocation11], %s397
          %s400 = sshll.u32 %s6, 4
          %s401 = int_to_ptr.vmem [resolvable:$true] %s400
          %403 = dma.vmem_to_smem %s401, 16, [#allocation12], [#allocation11]
        $region24: #{tpu_custom_call.1} parent=11 // pred_fallthru
          _
        // Predicated region
        $region25: #{tpu_custom_call.1} parent=11 // pred_check
          %p404 = pneg %p241
        $region26: #{tpu_custom_call.1} parent=11 // pred_check_branch
          %406 = sbr.rel (%p404) target = $region28
        $region27: #{tpu_custom_call.1} parent=11 // pred_region
          %s408 = ssub.s32 16, 16
          %409 = vsyncadd [#allocation14], %s408
          %s411 = sshll.u32 %s7, 4
          %s412 = int_to_ptr.vmem [resolvable:$true] %s411
          %414 = dma.vmem_to_smem %s412, 16, [#allocation13], [#allocation14]
        $region28: #{tpu_custom_call.1} parent=11 // pred_fallthru
          _
        // Predicated region
        $region29: #{tpu_custom_call.1} parent=11 // pred_check
          %p415 = pneg %p262
        $region30: #{tpu_custom_call.1} parent=11 // pred_check_branch
          %417 = sbr.rel (%p415) target = $region32
        $region31: #{tpu_custom_call.1} parent=11 // pred_region
          %s419 = ssub.s32 16, 16
          %420 = vsyncadd [#allocation14], %s419
          %s422 = sshll.u32 %s8, 4
          %s423 = int_to_ptr.vmem [resolvable:$true] %s422
          %425 = dma.vmem_to_smem %s423, 16, [#allocation15], [#allocation14]
        $region32: #{tpu_custom_call.1} parent=11 // pred_fallthru
          _
        // Predicated region
        $region33: #{tpu_custom_call.1} parent=11 // pred_check
          %p426 = pneg %p283
        $region34: #{tpu_custom_call.1} parent=11 // pred_check_branch
          %428 = sbr.rel (%p426) target = $region36
        $region35: #{tpu_custom_call.1} parent=11 // pred_region
          %s430 = ssub.s32 16, 16
          %431 = vsyncadd [#allocation17], %s430
          %s433 = sshll.u32 %s9, 4
          %s434 = int_to_ptr.vmem [resolvable:$true] %s433
          %436 = dma.vmem_to_smem %s434, 16, [#allocation16], [#allocation17]
        $region36: #{tpu_custom_call.1} parent=11 // pred_fallthru
          _
        // Predicated region
        $region37: #{tpu_custom_call.1} parent=11 // pred_check
          %p437 = pneg %p304
        $region38: #{tpu_custom_call.1} parent=11 // pred_check_branch
          %439 = sbr.rel (%p437) target = $region40
        $region39: #{tpu_custom_call.1} parent=11 // pred_region
          _
        $region40: #{tpu_custom_call.1} parent=11 // pred_fallthru
          _
      $region12: #{tpu_custom_call.1} parent=5 // pred_fallthru
        _
      %p440 = scmp.lt.s32.totalorder %s33, 2
      // Predicated region
      $region41: #{tpu_custom_call.1} parent=5 // pred_check
        %p441 = pneg %p440
      $region42: #{tpu_custom_call.1} parent=5 // pred_check_branch
        %443 = sbr.rel (%p441) target = $region44
      $region43: #{tpu_custom_call.1} parent=5 // pred_region
        // Predicated region
        $region45: #{tpu_custom_call.1} parent=43 // pred_check
          %p444 = pneg %p67
        $region46: #{tpu_custom_call.1} parent=43 // pred_check_branch
          %446 = sbr.rel (%p444) target = $region48
        $region47: #{tpu_custom_call.1} parent=43 // pred_region
          %p447 = scmp.lt.s32.totalorder %s40, 1
          %s448 = scalar_select %p447, %s40, 1
          %p449 = scmp.lt.s32.totalorder %s41, 0
          %s450 = scalar_select %p449, %s41, 0
          %s451 = sadd.s32 %s450, %s448
          %s452 = scalar_lea.vmem %s0, %s451
        $region48: #{tpu_custom_call.1} parent=43 // pred_fallthru
          _
        // Predicated region
        $region49: #{tpu_custom_call.1} parent=43 // pred_check
          %p453 = pneg %p95
        $region50: #{tpu_custom_call.1} parent=43 // pred_check_branch
          %455 = sbr.rel (%p453) target = $region52
        $region51: #{tpu_custom_call.1} parent=43 // pred_region
          %s456 = sand.u32 %s85, 1
          %s457 = scalar_lea.sflag [#allocation6], %s456
          %s458 = sand.u32 %s85, 1
          %s459 = scalar_lea.vmem [#allocation5], %s458
          %s461 = ssub.s32 16, 16
          %462 = vsyncadd %s457, %s461
          %s463 = sadd.s32 %s41, %s40
          %s464 = smul.addr %s463, 16
          %s465 = scalar_lea.hbm %s1, %s464
          %s467 = sshll.u32 %s459, 4
          %s468 = int_to_ptr.vmem [resolvable:$true] %s467
          %470 = dma.hbm_to_vmem [thread:$0]  %s465, 16, %s468, %s457
        $region52: #{tpu_custom_call.1} parent=43 // pred_fallthru
          _
        // Predicated region
        $region53: #{tpu_custom_call.1} parent=43 // pred_check
          %p471 = pneg %p123
        $region54: #{tpu_custom_call.1} parent=43 // pred_check_branch
          %473 = sbr.rel (%p471) target = $region56
        $region55: #{tpu_custom_call.1} parent=43 // pred_region
          %p474 = scmp.lt.s32.totalorder %s40, 1
          %s475 = scalar_select %p474, %s40, 1
          %p476 = scmp.lt.s32.totalorder %s41, 0
          %s477 = scalar_select %p476, %s41, 0
          %s478 = sadd.s32 %s477, %s475
          %s479 = scalar_lea.vmem %s2, %s478
        $region56: #{tpu_custom_call.1} parent=43 // pred_fallthru
          _
        // Predicated region
        $region57: #{tpu_custom_call.1} parent=43 // pred_check
          %p480 = pneg %p151
        $region58: #{tpu_custom_call.1} parent=43 // pred_check_branch
          %482 = sbr.rel (%p480) target = $region60
        $region59: #{tpu_custom_call.1} parent=43 // pred_region
          %p483 = scmp.lt.s32.totalorder %s40, 1
          %s484 = scalar_select %p483, %s40, 1
          %p485 = scmp.lt.s32.totalorder %s41, 0
          %s486 = scalar_select %p485, %s41, 0
          %s487 = sadd.s32 %s486, %s484
          %s488 = scalar_lea.vmem %s3, %s487
        $region60: #{tpu_custom_call.1} parent=43 // pred_fallthru
          _
      $region44: #{tpu_custom_call.1} parent=5 // pred_fallthru
        _
      %p489 = scmp.le.s32.totalorder 1, %s33
      %p490 = scmp.lt.s32.totalorder %s33, 3
      %p491 = pnand %p489, %p490
      %p492 = pneg %p491
      // Predicated region
      $region61: #{tpu_custom_call.1} parent=5 // pred_check
        _
      $region62: #{tpu_custom_call.1} parent=5 // pred_check_branch
        %494 = sbr.rel (%p491) target = $region64
      $region63: #{tpu_custom_call.1} parent=5 // pred_region
        %s495 = ssub.s32 %s33, 1
        %s496 = sand.u32 %s88, 1
        %s497 = scalar_lea.sflag [#allocation6], %s496
        %s498 = sand.u32 %s88, 1
        %s499 = scalar_lea.vmem [#allocation5], %s498
        // Predicated region
        $region65: #{tpu_custom_call.1} parent=63 // pred_check
          %p500 = pneg %p101
        $region66: #{tpu_custom_call.1} parent=63 // pred_check_branch
          %502 = sbr.rel (%p500) target = $region68
        $region67: #{tpu_custom_call.1} parent=63 // pred_region
          %503 = dma.done %s497, 16
        $region68: #{tpu_custom_call.1} parent=63 // pred_fallthru
          _
        // Predicated region
        $region69: #{tpu_custom_call.1} parent=63 // pred_check
          %p504 = pneg %p178
        $region70: #{tpu_custom_call.1} parent=63 // pred_check_branch
          %506 = sbr.rel (%p504) target = $region72
        $region71: #{tpu_custom_call.1} parent=63 // pred_region
          %507 = dma.done [#allocation8], 16
        $region72: #{tpu_custom_call.1} parent=63 // pred_fallthru
          _
        // Predicated region
        $region73: #{tpu_custom_call.1} parent=63 // pred_check
          %p508 = pneg %p199
        $region74: #{tpu_custom_call.1} parent=63 // pred_check_branch
          %510 = sbr.rel (%p508) target = $region76
        $region75: #{tpu_custom_call.1} parent=63 // pred_region
          %511 = dma.done [#allocation11], 16
        $region76: #{tpu_custom_call.1} parent=63 // pred_fallthru
          _
        // Predicated region
        $region77: #{tpu_custom_call.1} parent=63 // pred_check
          %p512 = pneg %p220
        $region78: #{tpu_custom_call.1} parent=63 // pred_check_branch
          %514 = sbr.rel (%p512) target = $region80
        $region79: #{tpu_custom_call.1} parent=63 // pred_region
          %515 = dma.done [#allocation11], 16
        $region80: #{tpu_custom_call.1} parent=63 // pred_fallthru
          _
        // Predicated region
        $region81: #{tpu_custom_call.1} parent=63 // pred_check
          %p516 = pneg %p241
        $region82: #{tpu_custom_call.1} parent=63 // pred_check_branch
          %518 = sbr.rel (%p516) target = $region84
        $region83: #{tpu_custom_call.1} parent=63 // pred_region
          %519 = dma.done [#allocation14], 16
        $region84: #{tpu_custom_call.1} parent=63 // pred_fallthru
          _
        // Predicated region
        $region85: #{tpu_custom_call.1} parent=63 // pred_check
          %p520 = pneg %p262
        $region86: #{tpu_custom_call.1} parent=63 // pred_check_branch
          %522 = sbr.rel (%p520) target = $region88
        $region87: #{tpu_custom_call.1} parent=63 // pred_region
          %523 = dma.done [#allocation14], 16
        $region88: #{tpu_custom_call.1} parent=63 // pred_fallthru
          _
        // Predicated region
        $region89: #{tpu_custom_call.1} parent=63 // pred_check
          %p524 = pneg %p283
        $region90: #{tpu_custom_call.1} parent=63 // pred_check_branch
          %526 = sbr.rel (%p524) target = $region92
        $region91: #{tpu_custom_call.1} parent=63 // pred_region
          %527 = dma.done [#allocation17], 16
        $region92: #{tpu_custom_call.1} parent=63 // pred_fallthru
          _
        %528 = sfence
        %p529 = scmp.lt.s32.totalorder %s42, 1
        %s530 = scalar_select %p529, %s42, 1
        %p531 = scmp.lt.s32.totalorder %s43, 0
        %s532 = scalar_select %p531, %s43, 0
        %s533 = sadd.s32 %s532, %s530
        %s534 = scalar_lea.vmem %s0, %s533
        %p535 = pneg %p73
        %p536 = pneg %p70
        %s537 = sand.u32 %s88, 1
        %s538 = scalar_lea.sflag [#allocation6], %s537
        %s539 = sand.u32 %s88, 1
        %s540 = scalar_lea.vmem [#allocation5], %s539
        %p541 = pneg %p101
        %p542 = pneg %p98
        %p543 = scmp.lt.s32.totalorder %s42, 1
        %s544 = scalar_select %p543, %s42, 1
        %p545 = scmp.lt.s32.totalorder %s43, 0
        %s546 = scalar_select %p545, %s43, 0
        %s547 = sadd.s32 %s546, %s544
        %s548 = scalar_lea.vmem %s2, %s547
        %p549 = pneg %p129
        %p550 = pneg %p126
        %p551 = scmp.lt.s32.totalorder %s42, 1
        %s552 = scalar_select %p551, %s42, 1
        %p553 = scmp.lt.s32.totalorder %s43, 0
        %s554 = scalar_select %p553, %s43, 0
        %s555 = sadd.s32 %s554, %s552
        %s556 = scalar_lea.vmem %s3, %s555
        %p557 = pneg %p157
        %p558 = pneg %p154
        %p559 = pneg %p178
        %p560 = pneg %p175
        %p561 = pneg %p199
        %p562 = pneg %p196
        %p563 = pneg %p220
        %p564 = pneg %p217
        %p565 = pneg %p241
        %p566 = pneg %p238
        %p567 = pneg %p262
        %p568 = pneg %p259
        %p569 = pneg %p283
        %p570 = pneg %p280
        %p571 = pneg %p304
        %p572 = pneg %p301
        %p573 = pneg %p330
        %p574 = pneg %p327
        %s575 = sand.u32 %s317, 1
        %s576 = scalar_lea.sflag [#allocation7], %s575
        %s577 = sand.u32 %s317, 1
        %s578 = scalar_lea.vmem [#allocation18], %s577
        %p579 = pneg %p356
        %p580 = pneg %p353
        %s581 = sand.u32 %s343, 1
        %s582 = scalar_lea.sflag [#allocation20], %s581
        %s583 = sand.u32 %s343, 1
        %s584 = scalar_lea.vmem [#allocation19], %s583
        %p585 = scmp.lt.s32.totalorder %s42, 1
        %s586 = scalar_select %p585, %s42, 1
        %p587 = scmp.lt.s32.totalorder %s43, 0
        %s588 = scalar_select %p587, %s43, 0
        %s589 = sadd.s32 %s588, %s586
        %s590 = scalar_lea.vmem %s0, %s589
        %p591 = scmp.lt.s32.totalorder %s42, 1
        %s592 = scalar_select %p591, %s42, 1
        %p593 = scmp.lt.s32.totalorder %s43, 0
        %s594 = scalar_select %p593, %s43, 0
        %s595 = sadd.s32 %s594, %s592
        %s596 = scalar_lea.vmem %s2, %s595
        %p597 = scmp.lt.s32.totalorder %s42, 1
        %s598 = scalar_select %p597, %s42, 1
        %p599 = scmp.lt.s32.totalorder %s43, 0
        %s600 = scalar_select %p599, %s43, 0
        %s601 = sadd.s32 %s600, %s598
        %s602 = scalar_lea.vmem %s3, %s601
        %p603 = scmp.eq.s32.totalorder %s43, 0
        // Predicated region
        $region93: #{tpu_custom_call.1} parent=63 // pred_check
          %p604 = pneg %p603
        $region94: #{tpu_custom_call.1} parent=63 // pred_check_branch
          %606 = sbr.rel (%p604) target = $region96
        $region95: #{tpu_custom_call.1} parent=63 // pred_region
          %607 = vst [vmem:[#allocation2] sm:$0x1] 0.0
          %608 = vst [vmem:[#allocation3] sm:$0x1] 0.0
        $region96: #{tpu_custom_call.1} parent=63 // pred_fallthru
          _
        %s609 = sld [smem:[#allocation9 + %s42]]
        %s610 = sld [smem:[#allocation10 + %s42]]
        %s611 = sld [smem:[#allocation12]]
        %s612 = sld [smem:[#allocation12 + $0x1]]
        %s613 = sld [smem:[#allocation12 + $0x2]]
        %s614 = sld [smem:[#allocation12 + $0x3]]
        %s615 = sld [smem:[#allocation12 + $0x4]]
        %s616 = sld [smem:[#allocation12 + $0x5]]
        %s617 = sld [smem:[#allocation12 + $0x6]]
        %s618 = sld [smem:[#allocation12 + $0x7]]
        %s619 = sld [smem:[#allocation12 + $0x8]]
        %s620 = sld [smem:[#allocation12 + $0x9]]
        %s621 = sld [smem:[#allocation12 + $0xa]]
        %s622 = sld [smem:[#allocation12 + $0xb]]
        %s623 = sld [smem:[#allocation12 + $0xc]]
        %s624 = sld [smem:[#allocation12 + $0xd]]
        %s625 = sld [smem:[#allocation12 + $0xe]]
        %s626 = sld [smem:[#allocation12 + $0xf]]
        %s627 = sld [smem:[#allocation13]]
        %s628 = sld [smem:[#allocation13 + $0x1]]
        %s629 = sld [smem:[#allocation13 + $0x2]]
        %s630 = sld [smem:[#allocation13 + $0x3]]
        %s631 = sld [smem:[#allocation13 + $0x4]]
        %s632 = sld [smem:[#allocation13 + $0x5]]
        %s633 = sld [smem:[#allocation13 + $0x6]]
        %s634 = sld [smem:[#allocation13 + $0x7]]
        %s635 = sld [smem:[#allocation13 + $0x8]]
        %s636 = sld [smem:[#allocation13 + $0x9]]
        %s637 = sld [smem:[#allocation13 + $0xa]]
        %s638 = sld [smem:[#allocation13 + $0xb]]
        %s639 = sld [smem:[#allocation13 + $0xc]]
        %s640 = sld [smem:[#allocation13 + $0xd]]
        %s641 = sld [smem:[#allocation13 + $0xe]]
        %s642 = sld [smem:[#allocation13 + $0xf]]
        %s643 = sld [smem:[#allocation15]]
        %s644 = sld [smem:[#allocation15 + $0x1]]
        %s645 = sld [smem:[#allocation15 + $0x2]]
        %s646 = sld [smem:[#allocation15 + $0x3]]
        %s647 = sld [smem:[#allocation15 + $0x4]]
        %s648 = sld [smem:[#allocation15 + $0x5]]
        %s649 = sld [smem:[#allocation15 + $0x6]]
        %s650 = sld [smem:[#allocation15 + $0x7]]
        %s651 = sld [smem:[#allocation15 + $0x8]]
        %s652 = sld [smem:[#allocation15 + $0x9]]
        %s653 = sld [smem:[#allocation15 + $0xa]]
        %s654 = sld [smem:[#allocation15 + $0xb]]
        %s655 = sld [smem:[#allocation15 + $0xc]]
        %s656 = sld [smem:[#allocation15 + $0xd]]
        %s657 = sld [smem:[#allocation15 + $0xe]]
        %s658 = sld [smem:[#allocation15 + $0xf]]
        %s659 = sld [smem:[#allocation16]]
        %s660 = sld [smem:[#allocation16 + $0x1]]
        %s661 = sld [smem:[#allocation16 + $0x2]]
        %s662 = sld [smem:[#allocation16 + $0x3]]
        %s663 = sld [smem:[#allocation16 + $0x4]]
        %s664 = sld [smem:[#allocation16 + $0x5]]
        %s665 = sld [smem:[#allocation16 + $0x6]]
        %s666 = sld [smem:[#allocation16 + $0x7]]
        %s667 = sld [smem:[#allocation16 + $0x8]]
        %s668 = sld [smem:[#allocation16 + $0x9]]
        %s669 = sld [smem:[#allocation16 + $0xa]]
        %s670 = sld [smem:[#allocation16 + $0xb]]
        %s671 = sld [smem:[#allocation16 + $0xc]]
        %s672 = sld [smem:[#allocation16 + $0xd]]
        %s673 = sld [smem:[#allocation16 + $0xe]]
        %s674 = sld [smem:[#allocation16 + $0xf]]
        %s675 = sld [smem:[#allocation4]]
        %v676 = vld [vmem:[%s590] sm:$0x1]
        %v677 = vld [vmem:[%s499] sm:$0x1]
        %v678 = vld [vmem:[%s596] sm:$0x1]
        %v679 = vld [vmem:[%s602] sm:$0x1]
        %v680 = vstv %s609
        %v681 = vmul.f32 %v680, %v676
        %v682 = vstv %s610
        %v683 = vmul.f32 %v682, %v677
        %v684 = vadd.f32 %v681, %v683
        %v685 = vmul.f32 %v679, %v676
        %v686 = vstv %s611
        %v687 = vmul.f32 %v686, %v685
        %v688 = vstv %s627
        %v689 = vmul.f32 %v688, %v684
        %v690 = vadd.f32 %v687, %v689
        %v691 = vstv %s643
        %v692 = vadd.f32 %v690, %v691
        %v693 = vmax.f32 %v692, 0.0
        %v694 = vstv %s659
        %v695 = vmul.f32 %v694, %v693
        %v696 = vstv %s612
        %v697 = vmul.f32 %v696, %v685
        %v698 = vstv %s628
        %v699 = vmul.f32 %v698, %v684
        %v700 = vadd.f32 %v697, %v699
        %v701 = vstv %s644
        %v702 = vadd.f32 %v700, %v701
        %v703 = vmax.f32 %v702, 0.0
        %v704 = vstv %s660
        %v705 = vmul.f32 %v704, %v703
        %v706 = vadd.f32 %v695, %v705
        %v707 = vstv %s613
        %v708 = vmul.f32 %v707, %v685
        %v709 = vstv %s629
        %v710 = vmul.f32 %v709, %v684
        %v711 = vadd.f32 %v708, %v710
        %v712 = vstv %s645
        %v713 = vadd.f32 %v711, %v712
        %v714 = vmax.f32 %v713, 0.0
        %v715 = vstv %s661
        %v716 = vmul.f32 %v715, %v714
        %v717 = vadd.f32 %v706, %v716
        %v718 = vstv %s614
        %v719 = vmul.f32 %v718, %v685
        %v720 = vstv %s630
        %v721 = vmul.f32 %v720, %v684
        %v722 = vadd.f32 %v719, %v721
        %v723 = vstv %s646
        %v724 = vadd.f32 %v722, %v723
        %v725 = vmax.f32 %v724, 0.0
        %v726 = vstv %s662
        %v727 = vmul.f32 %v726, %v725
        %v728 = vadd.f32 %v717, %v727
        %v729 = vstv %s615
        %v730 = vmul.f32 %v729, %v685
        %v731 = vstv %s631
        %v732 = vmul.f32 %v731, %v684
        %v733 = vadd.f32 %v730, %v732
        %v734 = vstv %s647
        %v735 = vadd.f32 %v733, %v734
        %v736 = vmax.f32 %v735, 0.0
        %v737 = vstv %s663
        %v738 = vmul.f32 %v737, %v736
        %v739 = vadd.f32 %v728, %v738
        %v740 = vstv %s616
        %v741 = vmul.f32 %v740, %v685
        %v742 = vstv %s632
        %v743 = vmul.f32 %v742, %v684
        %v744 = vadd.f32 %v741, %v743
        %v745 = vstv %s648
        %v746 = vadd.f32 %v744, %v745
        %v747 = vmax.f32 %v746, 0.0
        %v748 = vstv %s664
        %v749 = vmul.f32 %v748, %v747
        %v750 = vadd.f32 %v739, %v749
        %v751 = vstv %s617
        %v752 = vmul.f32 %v751, %v685
        %v753 = vstv %s633
        %v754 = vmul.f32 %v753, %v684
        %v755 = vadd.f32 %v752, %v754
        %v756 = vstv %s649
        %v757 = vadd.f32 %v755, %v756
        %v758 = vmax.f32 %v757, 0.0
        %v759 = vstv %s665
        %v760 = vmul.f32 %v759, %v758
        %v761 = vadd.f32 %v750, %v760
        %v762 = vstv %s618
        %v763 = vmul.f32 %v762, %v685
        %v764 = vstv %s634
        %v765 = vmul.f32 %v764, %v684
        %v766 = vadd.f32 %v763, %v765
        %v767 = vstv %s650
        %v768 = vadd.f32 %v766, %v767
        %v769 = vmax.f32 %v768, 0.0
        %v770 = vstv %s666
        %v771 = vmul.f32 %v770, %v769
        %v772 = vadd.f32 %v761, %v771
        %v773 = vstv %s619
        %v774 = vmul.f32 %v773, %v685
        %v775 = vstv %s635
        %v776 = vmul.f32 %v775, %v684
        %v777 = vadd.f32 %v774, %v776
        %v778 = vstv %s651
        %v779 = vadd.f32 %v777, %v778
        %v780 = vmax.f32 %v779, 0.0
        %v781 = vstv %s667
        %v782 = vmul.f32 %v781, %v780
        %v783 = vadd.f32 %v772, %v782
        %v784 = vstv %s620
        %v785 = vmul.f32 %v784, %v685
        %v786 = vstv %s636
        %v787 = vmul.f32 %v786, %v684
        %v788 = vadd.f32 %v785, %v787
        %v789 = vstv %s652
        %v790 = vadd.f32 %v788, %v789
        %v791 = vmax.f32 %v790, 0.0
        %v792 = vstv %s668
        %v793 = vmul.f32 %v792, %v791
        %v794 = vadd.f32 %v783, %v793
        %v795 = vstv %s621
        %v796 = vmul.f32 %v795, %v685
        %v797 = vstv %s637
        %v798 = vmul.f32 %v797, %v684
        %v799 = vadd.f32 %v796, %v798
        %v800 = vstv %s653
        %v801 = vadd.f32 %v799, %v800
        %v802 = vmax.f32 %v801, 0.0
        %v803 = vstv %s669
        %v804 = vmul.f32 %v803, %v802
        %v805 = vadd.f32 %v794, %v804
        %v806 = vstv %s622
        %v807 = vmul.f32 %v806, %v685
        %v808 = vstv %s638
        %v809 = vmul.f32 %v808, %v684
        %v810 = vadd.f32 %v807, %v809
        %v811 = vstv %s654
        %v812 = vadd.f32 %v810, %v811
        %v813 = vmax.f32 %v812, 0.0
        %v814 = vstv %s670
        %v815 = vmul.f32 %v814, %v813
        %v816 = vadd.f32 %v805, %v815
        %v817 = vstv %s623
        %v818 = vmul.f32 %v817, %v685
        %v819 = vstv %s639
        %v820 = vmul.f32 %v819, %v684
        %v821 = vadd.f32 %v818, %v820
        %v822 = vstv %s655
        %v823 = vadd.f32 %v821, %v822
        %v824 = vmax.f32 %v823, 0.0
        %v825 = vstv %s671
        %v826 = vmul.f32 %v825, %v824
        %v827 = vadd.f32 %v816, %v826
        %v828 = vstv %s624
        %v829 = vmul.f32 %v828, %v685
        %v830 = vstv %s640
        %v831 = vmul.f32 %v830, %v684
        %v832 = vadd.f32 %v829, %v831
        %v833 = vstv %s656
        %v834 = vadd.f32 %v832, %v833
        %v835 = vmax.f32 %v834, 0.0
        %v836 = vstv %s672
        %v837 = vmul.f32 %v836, %v835
        %v838 = vadd.f32 %v827, %v837
        %v839 = vstv %s625
        %v840 = vmul.f32 %v839, %v685
        %v841 = vstv %s641
        %v842 = vmul.f32 %v841, %v684
        %v843 = vadd.f32 %v840, %v842
        %v844 = vstv %s657
        %v845 = vadd.f32 %v843, %v844
        %v846 = vmax.f32 %v845, 0.0
        %v847 = vstv %s673
        %v848 = vmul.f32 %v847, %v846
        %v849 = vadd.f32 %v838, %v848
        %v850 = vstv %s626
        %v851 = vmul.f32 %v850, %v685
        %v852 = vstv %s642
        %v853 = vmul.f32 %v852, %v684
        %v854 = vadd.f32 %v851, %v853
        %v855 = vstv %s658
        %v856 = vadd.f32 %v854, %v855
        %v857 = vmax.f32 %v856, 0.0
        %v858 = vstv %s674
        %v859 = vmul.f32 %v858, %v857
        %v860 = vadd.f32 %v849, %v859
        %v861 = vsub.f32 %v678, %v679
        %v862 = vsub.f32 %v677, %v860
        %v863 = vstv %s675
        %v864 = vsub.f32 %v862, %v863
        %v865 = vmul.f32 %v864, %v861
        %v866 = vld [vmem:[#allocation2] sm:$0x1]
        %v867 = vmul.f32 %v865, %v865
        %v868 = vadd.f32 %v866, %v867
        %869 = vst [vmem:[#allocation2] sm:$0x1] %v868
        %v870 = vld [vmem:[#allocation3] sm:$0x1]
        %v871 = vadd.f32 %v870, %v861
        %872 = vst [vmem:[#allocation3] sm:$0x1] %v871
        // Predicated region
        $region97: #{tpu_custom_call.1} parent=63 // pred_check
          %p873 = pneg %p603
        $region98: #{tpu_custom_call.1} parent=63 // pred_check_branch
          %875 = sbr.rel (%p873) target = $region100
        $region99: #{tpu_custom_call.1} parent=63 // pred_region
          %v876 = vld [vmem:[#allocation2] sm:$0x1]
          %v877 = vadd.f32 %v876, 0.0
          %878 = vst [vmem:[%s578] sm:$0x1] %v877
          %v879 = vld [vmem:[#allocation3] sm:$0x1]
          %v880 = vadd.f32 %v879, 0.0
          %881 = vst [vmem:[%s584] sm:$0x1] %v880
        $region100: #{tpu_custom_call.1} parent=63 // pred_fallthru
          _
        %s882 = sand.u32 %s317, 1
        %s883 = scalar_lea.sflag [#allocation7], %s882
        %s884 = sand.u32 %s317, 1
        %s885 = scalar_lea.vmem [#allocation18], %s884
        %s886 = sand.u32 %s343, 1
        %s887 = scalar_lea.sflag [#allocation20], %s886
        %s888 = sand.u32 %s343, 1
        %s889 = scalar_lea.vmem [#allocation19], %s888
        // Predicated region
        $region101: #{tpu_custom_call.1} parent=63 // pred_check
          %p890 = pneg %p327
        $region102: #{tpu_custom_call.1} parent=63 // pred_check_branch
          %892 = sbr.rel (%p890) target = $region104
        $region103: #{tpu_custom_call.1} parent=63 // pred_region
          %s894 = ssub.s32 16, 16
          %895 = vsyncadd %s883, %s894
          %s896 = smul.addr %s42, 16
          %s897 = scalar_lea.hbm %s11, %s896
          %s899 = sshll.u32 %s885, 4
          %s900 = int_to_ptr.vmem [resolvable:$true] %s899
          %902 = dma.vmem_to_hbm [thread:$0]  %s900, 16, %s897, %s883
        $region104: #{tpu_custom_call.1} parent=63 // pred_fallthru
          _
        // Predicated region
        $region105: #{tpu_custom_call.1} parent=63 // pred_check
          %p903 = pneg %p353
        $region106: #{tpu_custom_call.1} parent=63 // pred_check_branch
          %905 = sbr.rel (%p903) target = $region108
        $region107: #{tpu_custom_call.1} parent=63 // pred_region
          %s907 = ssub.s32 16, 16
          %908 = vsyncadd %s887, %s907
          %s909 = smul.addr %s42, 16
          %s910 = scalar_lea.hbm %s12, %s909
          %s912 = sshll.u32 %s889, 4
          %s913 = int_to_ptr.vmem [resolvable:$true] %s912
          %915 = dma.vmem_to_hbm [thread:$0]  %s913, 16, %s910, %s887
        $region108: #{tpu_custom_call.1} parent=63 // pred_fallthru
          _
      $region64: #{tpu_custom_call.1} parent=5 // pred_fallthru
        _
      %p916 = scmp.le.s32.totalorder 2, %s33
      // Predicated region
      $region109: #{tpu_custom_call.1} parent=5 // pred_check
        %p917 = pneg %p916
      $region110: #{tpu_custom_call.1} parent=5 // pred_check_branch
        %919 = sbr.rel (%p917) target = $region112
      $region111: #{tpu_custom_call.1} parent=5 // pred_region
        %s920 = ssub.s32 %s33, 2
        // Predicated region
        $region113: #{tpu_custom_call.1} parent=111 // pred_check
          %p921 = pneg %p333
        $region114: #{tpu_custom_call.1} parent=111 // pred_check_branch
          %923 = sbr.rel (%p921) target = $region116
        $region115: #{tpu_custom_call.1} parent=111 // pred_region
          %s924 = sand.u32 %s318, 1
          %s925 = scalar_lea.sflag [#allocation7], %s924
          %s926 = sand.u32 %s318, 1
          %s927 = scalar_lea.vmem [#allocation18], %s926
          %928 = dma.done %s925, 16
        $region116: #{tpu_custom_call.1} parent=111 // pred_fallthru
          _
        // Predicated region
        $region117: #{tpu_custom_call.1} parent=111 // pred_check
          %p929 = pneg %p359
        $region118: #{tpu_custom_call.1} parent=111 // pred_check_branch
          %931 = sbr.rel (%p929) target = $region120
        $region119: #{tpu_custom_call.1} parent=111 // pred_region
          %s932 = sand.u32 %s344, 1
          %s933 = scalar_lea.sflag [#allocation20], %s932
          %s934 = sand.u32 %s344, 1
          %s935 = scalar_lea.vmem [#allocation19], %s934
          %936 = dma.done %s933, 16
        $region120: #{tpu_custom_call.1} parent=111 // pred_fallthru
          _
      $region112: #{tpu_custom_call.1} parent=5 // pred_fallthru
        _
    $region6: #{tpu_custom_call.1} parent=1 // loop_footer
      %s37 = sadd.s32 1, %s33
    $region7: #{tpu_custom_call.1} parent=1 // loop_footer_branch
      %32 = sbr.rel target = $region3
    $region8: #{tpu_custom_call.1} parent=1 // loop_exit
      _
    %937 = vsyncpa [#allocation6], 1
    %s938 = scalar_lea.sflag [#allocation6], 1
    %939 = vsyncpa %s938, 1
    %940 = vsyncpa [#allocation7], 1
    %s941 = scalar_lea.sflag [#allocation7], 1
    %942 = vsyncpa %s941, 1
    %943 = vsyncpa [#allocation20], 1
    %s944 = scalar_lea.sflag [#allocation20], 1
    %945 = vsyncpa %s944, 1
    %946 = vsyncpa [#allocation8], 1
    %s947 = scalar_lea.sflag [#allocation8], 1
    %948 = vsyncpa %s947, 1
    %949 = vsyncpa [#allocation11], 1
    %950 = vsyncpa [#allocation14], 1
    %951 = vsyncpa [#allocation17], 1

</llo_original>
